<compile_context>
chip_gen: v6e
topology: v6e:2x2x1
jax: 0.10.0
libtpu: 0.0.40
codegen_flags: <defaults>
</compile_context>

<pallas_src>
import functools
import math

import jax
import jax.numpy as jnp
from jax.experimental import pallas as pl
from jax.experimental.pallas import tpu as pltpu


def _mha_kernel(x_ref, wq_ref, wk_ref, wv_ref, wo_ref, o_ref, *, scale):
    # x_ref:  (1, S, D)
    # wq/wk/wv_ref: (H, D, d_head)   -- per-head input-projection columns
    # wo_ref: (H, d_head, D)         -- per-head output-projection rows
    # o_ref:  (1, S, D)
    x = x_ref[0].astype(jnp.float32)                      # (S, D)
    S, D = x.shape
    n_heads = wq_ref.shape[0]

    # Causal mask (2-D iota is required on TPU).
    row = jax.lax.broadcasted_iota(jnp.int32, (S, S), 0)
    col = jax.lax.broadcasted_iota(jnp.int32, (S, S), 1)
    causal = row >= col
    neg_big = jnp.float32(-1e30)

    y = jnp.zeros((S, D), jnp.float32)
    for h in range(n_heads):                              # static unroll, H small
        wq = wq_ref[h].astype(jnp.float32)                # (D, d_head)
        wk = wk_ref[h].astype(jnp.float32)
        wv = wv_ref[h].astype(jnp.float32)
        wo = wo_ref[h].astype(jnp.float32)                # (d_head, D)

        q = jnp.dot(x, wq, preferred_element_type=jnp.float32)   # (S, d_head)
        k = jnp.dot(x, wk, preferred_element_type=jnp.float32)
        v = jnp.dot(x, wv, preferred_element_type=jnp.float32)

        s = jnp.dot(q, k.T, preferred_element_type=jnp.float32) * scale  # (S, S)
        s = jnp.where(causal, s, neg_big)

        # Numerically stable softmax in f32 (dropout p=0.0 -> identity).
        m = jnp.max(s, axis=-1, keepdims=True)
        p = jnp.exp(s - m)
        p = p / jnp.sum(p, axis=-1, keepdims=True)

        ctx = jnp.dot(p, v, preferred_element_type=jnp.float32)          # (S, d_head)
        # Output projection: accumulate this head's contribution.
        y = y + jnp.dot(ctx, wo, preferred_element_type=jnp.float32)     # (S, D)

    o_ref[0] = y.astype(o_ref.dtype)


def self_attention_multihead(x, wq, wk, wv, wo, *, n_heads):
    """Causal multi-head self-attention.

    x:  (B, S, d_model)
    wq, wk, wv, wo: (d_model, d_model) PyTorch nn.Linear weights (out, in);
                    the projection applied is `x @ W.T`.
    """
    B, S, D = x.shape
    assert D % n_heads == 0
    d_head = D // n_heads
    scale = 1.0 / math.sqrt(d_head)

    # Rearrange weights so per-head slicing is on the leading axis.
    # Effective matrices are W.T (in, out); columns of head h are
    # [h*d_head : (h+1)*d_head].
    wq_h = wq.T.reshape(D, n_heads, d_head).transpose(1, 0, 2)   # (H, D, d_head)
    wk_h = wk.T.reshape(D, n_heads, d_head).transpose(1, 0, 2)
    wv_h = wv.T.reshape(D, n_heads, d_head).transpose(1, 0, 2)
    wo_h = wo.T.reshape(n_heads, d_head, D)                      # (H, d_head, D)

    itemsize = jnp.dtype(x.dtype).itemsize
    cost = pl.CostEstimate(
        flops=int(B * (8 * S * D * D + 4 * S * S * D)),
        transcendentals=int(B * n_heads * S * S),
        bytes_accessed=int((2 * B * S * D + 4 * D * D) * itemsize),
    )

    kernel = functools.partial(_mha_kernel, scale=scale)
    return pl.pallas_call(
        kernel,
        out_shape=jax.ShapeDtypeStruct((B, S, D), x.dtype),
        grid_spec=pltpu.PrefetchScalarGridSpec(
            num_scalar_prefetch=0,
            grid=(B,),
            in_specs=[
                pl.BlockSpec((1, S, D), lambda b: (b, 0, 0)),
                pl.BlockSpec((n_heads, D, d_head), lambda b: (0, 0, 0)),
                pl.BlockSpec((n_heads, D, d_head), lambda b: (0, 0, 0)),
                pl.BlockSpec((n_heads, D, d_head), lambda b: (0, 0, 0)),
                pl.BlockSpec((n_heads, d_head, D), lambda b: (0, 0, 0)),
            ],
            out_specs=pl.BlockSpec((1, S, D), lambda b: (b, 0, 0)),
        ),
        compiler_params=pltpu.CompilerParams(
            dimension_semantics=("parallel",)),
        cost_estimate=cost,
    )(x, wq_h, wk_h, wv_h, wo_h)


def self_attention_reference(x, wq, wk, wv, wo, *, n_heads):
    """Pure-JAX reference mirroring the PyTorch forward (causal SDPA)."""
    B, S, D = x.shape
    d_head = D // n_heads
    q = (x @ wq.T).reshape(B, S, n_heads, d_head).transpose(0, 2, 1, 3)
    k = (x @ wk.T).reshape(B, S, n_heads, d_head).transpose(0, 2, 1, 3)
    v = (x @ wv.T).reshape(B, S, n_heads, d_head).transpose(0, 2, 1, 3)
    scores = jnp.einsum("bhqd,bhkd->bhqk", q, k) / math.sqrt(d_head)
    mask = jnp.tril(jnp.ones((S, S), dtype=bool))
    scores = jnp.where(mask, scores, -jnp.inf)
    p = jax.nn.softmax(scores, axis=-1)
    ctx = jnp.einsum("bhqk,bhkd->bhqd", p, v)
    ctx = ctx.transpose(0, 2, 1, 3).reshape(B, S, D)
    return ctx @ wo.T


if __name__ == "__main__":
    # Shapes implied by the module: d_model=32, n_heads=4 (d_head=8).
    batch, seq, d_model, n_heads = 2, 8, 32, 4

    key = jax.random.PRNGKey(0)
    kx, kq, kk, kv, ko = jax.random.split(key, 5)
    x = jax.random.normal(kx, (batch, seq, d_model), dtype=jnp.float32)
    init = 1.0 / math.sqrt(d_model)
    wq = jax.random.normal(kq, (d_model, d_model), dtype=jnp.float32) * init
    wk = jax.random.normal(kk, (d_model, d_model), dtype=jnp.float32) * init
    wv = jax.random.normal(kv, (d_model, d_model), dtype=jnp.float32) * init
    wo = jax.random.normal(ko, (d_model, d_model), dtype=jnp.float32) * init

    out = self_attention_multihead(x, wq, wk, wv, wo, n_heads=n_heads)
    out = jax.block_until_ready(out)

    ref = self_attention_reference(x, wq, wk, wv, wo, n_heads=n_heads)
    assert out.shape == (batch, seq, d_model)
    assert jnp.allclose(out, ref, atol=1e-4, rtol=1e-4), "mismatch vs reference"

    print("KERNEL_OK")
</pallas_src>

<mosaic_0001>
module attributes {stable_mosaic.version = 11 : i64} {
  func.func @_mha_kernel(%arg0: i32, %arg1: memref<1x8x32xf32, #tpu.memory_space<vmem>>, %arg2: memref<4x32x8xf32, #tpu.memory_space<vmem>>, %arg3: memref<4x32x8xf32, #tpu.memory_space<vmem>>, %arg4: memref<4x32x8xf32, #tpu.memory_space<vmem>>, %arg5: memref<4x8x32xf32, #tpu.memory_space<vmem>>, %arg6: memref<1x8x32xf32, #tpu.memory_space<vmem>>) attributes {dimension_semantics = [#tpu.dimension_semantics<parallel>], iteration_bounds = array<i64: 2>, scalar_prefetch = 0 : i64, scratch_operands = 0 : i64, tpu.core_type = #tpu.core_type<tc>, window_params = [{transform_indices = @transform_0, window_bounds = array<i64: 1, 8, 32>}, {pipeline_mode = #tpu.pipeline_mode<synchronous>, transform_indices = @transform_1, window_bounds = array<i64: 4, 32, 8>}, {pipeline_mode = #tpu.pipeline_mode<synchronous>, transform_indices = @transform_2, window_bounds = array<i64: 4, 32, 8>}, {pipeline_mode = #tpu.pipeline_mode<synchronous>, transform_indices = @transform_3, window_bounds = array<i64: 4, 32, 8>}, {pipeline_mode = #tpu.pipeline_mode<synchronous>, transform_indices = @transform_4, window_bounds = array<i64: 4, 8, 32>}, {transform_indices = @transform_5, window_bounds = array<i64: 1, 8, 32>}]} {
    %c0 = arith.constant 0 : index
    %c0_0 = arith.constant 0 : index
    %c0_1 = arith.constant 0 : index
    %0 = vector.load %arg1[%c0, %c0_0, %c0_1] : memref<1x8x32xf32, #tpu.memory_space<vmem>>, vector<1x8x32xf32>
    %1 = vector.shape_cast %0 : vector<1x8x32xf32> to vector<8x32xf32>
    %2 = tpu.iota {dimensions = array<i32: 0>} : vector<8x8xi32>
    %3 = tpu.iota {dimensions = array<i32: 1>} : vector<8x8xi32>
    %4 = arith.cmpi sge, %2, %3 : vector<8x8xi32>
    %cst = arith.constant 0.000000e+00 : f32
    %5 = vector.broadcast %cst : f32 to vector<8x32xf32>
    %c0_2 = arith.constant 0 : index
    %c0_3 = arith.constant 0 : index
    %c0_4 = arith.constant 0 : index
    %6 = vector.load %arg2[%c0_2, %c0_3, %c0_4] : memref<4x32x8xf32, #tpu.memory_space<vmem>>, vector<1x32x8xf32>
    %7 = vector.shape_cast %6 : vector<1x32x8xf32> to vector<32x8xf32>
    %c0_5 = arith.constant 0 : index
    %c0_6 = arith.constant 0 : index
    %c0_7 = arith.constant 0 : index
    %8 = vector.load %arg3[%c0_5, %c0_6, %c0_7] : memref<4x32x8xf32, #tpu.memory_space<vmem>>, vector<1x32x8xf32>
    %9 = vector.shape_cast %8 : vector<1x32x8xf32> to vector<32x8xf32>
    %c0_8 = arith.constant 0 : index
    %c0_9 = arith.constant 0 : index
    %c0_10 = arith.constant 0 : index
    %10 = vector.load %arg4[%c0_8, %c0_9, %c0_10] : memref<4x32x8xf32, #tpu.memory_space<vmem>>, vector<1x32x8xf32>
    %11 = vector.shape_cast %10 : vector<1x32x8xf32> to vector<32x8xf32>
    %c0_11 = arith.constant 0 : index
    %c0_12 = arith.constant 0 : index
    %c0_13 = arith.constant 0 : index
    %12 = vector.load %arg5[%c0_11, %c0_12, %c0_13] : memref<4x8x32xf32, #tpu.memory_space<vmem>>, vector<1x8x32xf32>
    %13 = vector.shape_cast %12 : vector<1x8x32xf32> to vector<8x32xf32>
    %cst_14 = arith.constant dense<0.000000e+00> : vector<8x8xf32>
    %14 = tpu.matmul %1, %7, %cst_14 {dimension_numbers = #tpu.dot_dimension_numbers<[1], [0], [0], [1], [0, 0, 1, 1], [], []>} : vector<8x32xf32>, vector<32x8xf32>, vector<8x8xf32> -> vector<8x8xf32>
    %cst_15 = arith.constant dense<0.000000e+00> : vector<8x8xf32>
    %15 = tpu.matmul %1, %9, %cst_15 {dimension_numbers = #tpu.dot_dimension_numbers<[1], [0], [0], [1], [0, 0, 1, 1], [], []>} : vector<8x32xf32>, vector<32x8xf32>, vector<8x8xf32> -> vector<8x8xf32>
    %cst_16 = arith.constant dense<0.000000e+00> : vector<8x8xf32>
    %16 = tpu.matmul %1, %11, %cst_16 {dimension_numbers = #tpu.dot_dimension_numbers<[1], [0], [0], [1], [0, 0, 1, 1], [], []>} : vector<8x32xf32>, vector<32x8xf32>, vector<8x8xf32> -> vector<8x8xf32>
    %17 = tpu.transpose %15, [1, 0] : vector<8x8xf32> -> vector<8x8xf32>
    %cst_17 = arith.constant dense<0.000000e+00> : vector<8x8xf32>
    %18 = tpu.matmul %14, %17, %cst_17 {dimension_numbers = #tpu.dot_dimension_numbers<[1], [0], [0], [1], [0, 0, 1, 1], [], []>} : vector<8x8xf32>, vector<8x8xf32>, vector<8x8xf32> -> vector<8x8xf32>
    %cst_18 = arith.constant 0.353553385 : f32
    %19 = vector.broadcast %cst_18 : f32 to vector<8x8xf32>
    %20 = arith.mulf %18, %19 : vector<8x8xf32>
    %cst_19 = arith.constant -1.000000e+30 : f32
    %21 = vector.broadcast %cst_19 : f32 to vector<8x8xf32>
    %22 = arith.select %4, %20, %21 : vector<8x8xi1>, vector<8x8xf32>
    %cst_20 = arith.constant dense<0xFF800000> : vector<8xf32>
    %23 = vector.multi_reduction <maximumf>, %22, %cst_20 [1] : vector<8x8xf32> to vector<8xf32>
    %24 = vector.shape_cast %23 : vector<8xf32> to vector<8x1xf32>
    %25 = vector.broadcast %24 : vector<8x1xf32> to vector<8x8xf32>
    %26 = arith.subf %22, %25 : vector<8x8xf32>
    %27 = math.exp %26 : vector<8x8xf32>
    %cst_21 = arith.constant dense<0.000000e+00> : vector<8xf32>
    %28 = vector.multi_reduction <add>, %27, %cst_21 [1] : vector<8x8xf32> to vector<8xf32>
    %29 = vector.shape_cast %28 : vector<8xf32> to vector<8x1xf32>
    %30 = vector.broadcast %29 : vector<8x1xf32> to vector<8x8xf32>
    %31 = arith.divf %27, %30 : vector<8x8xf32>
    %cst_22 = arith.constant dense<0.000000e+00> : vector<8x8xf32>
    %32 = tpu.matmul %31, %16, %cst_22 {dimension_numbers = #tpu.dot_dimension_numbers<[1], [0], [0], [1], [0, 0, 1, 1], [], []>} : vector<8x8xf32>, vector<8x8xf32>, vector<8x8xf32> -> vector<8x8xf32>
    %cst_23 = arith.constant dense<0.000000e+00> : vector<8x32xf32>
    %33 = tpu.matmul %32, %13, %cst_23 {dimension_numbers = #tpu.dot_dimension_numbers<[1], [0], [0], [1], [0, 0, 1, 1], [], []>} : vector<8x8xf32>, vector<8x32xf32>, vector<8x32xf32> -> vector<8x32xf32>
    %34 = arith.addf %5, %33 : vector<8x32xf32>
    %c1 = arith.constant 1 : index
    %c0_24 = arith.constant 0 : index
    %c0_25 = arith.constant 0 : index
    %35 = vector.load %arg2[%c1, %c0_24, %c0_25] : memref<4x32x8xf32, #tpu.memory_space<vmem>>, vector<1x32x8xf32>
    %36 = vector.shape_cast %35 : vector<1x32x8xf32> to vector<32x8xf32>
    %c1_26 = arith.constant 1 : index
    %c0_27 = arith.constant 0 : index
    %c0_28 = arith.constant 0 : index
    %37 = vector.load %arg3[%c1_26, %c0_27, %c0_28] : memref<4x32x8xf32, #tpu.memory_space<vmem>>, vector<1x32x8xf32>
    %38 = vector.shape_cast %37 : vector<1x32x8xf32> to vector<32x8xf32>
    %c1_29 = arith.constant 1 : index
    %c0_30 = arith.constant 0 : index
    %c0_31 = arith.constant 0 : index
    %39 = vector.load %arg4[%c1_29, %c0_30, %c0_31] : memref<4x32x8xf32, #tpu.memory_space<vmem>>, vector<1x32x8xf32>
    %40 = vector.shape_cast %39 : vector<1x32x8xf32> to vector<32x8xf32>
    %c1_32 = arith.constant 1 : index
    %c0_33 = arith.constant 0 : index
    %c0_34 = arith.constant 0 : index
    %41 = vector.load %arg5[%c1_32, %c0_33, %c0_34] : memref<4x8x32xf32, #tpu.memory_space<vmem>>, vector<1x8x32xf32>
    %42 = vector.shape_cast %41 : vector<1x8x32xf32> to vector<8x32xf32>
    %cst_35 = arith.constant dense<0.000000e+00> : vector<8x8xf32>
    %43 = tpu.matmul %1, %36, %cst_35 {dimension_numbers = #tpu.dot_dimension_numbers<[1], [0], [0], [1], [0, 0, 1, 1], [], []>} : vector<8x32xf32>, vector<32x8xf32>, vector<8x8xf32> -> vector<8x8xf32>
    %cst_36 = arith.constant dense<0.000000e+00> : vector<8x8xf32>
    %44 = tpu.matmul %1, %38, %cst_36 {dimension_numbers = #tpu.dot_dimension_numbers<[1], [0], [0], [1], [0, 0, 1, 1], [], []>} : vector<8x32xf32>, vector<32x8xf32>, vector<8x8xf32> -> vector<8x8xf32>
    %cst_37 = arith.constant dense<0.000000e+00> : vector<8x8xf32>
    %45 = tpu.matmul %1, %40, %cst_37 {dimension_numbers = #tpu.dot_dimension_numbers<[1], [0], [0], [1], [0, 0, 1, 1], [], []>} : vector<8x32xf32>, vector<32x8xf32>, vector<8x8xf32> -> vector<8x8xf32>
    %46 = tpu.transpose %44, [1, 0] : vector<8x8xf32> -> vector<8x8xf32>
    %cst_38 = arith.constant dense<0.000000e+00> : vector<8x8xf32>
    %47 = tpu.matmul %43, %46, %cst_38 {dimension_numbers = #tpu.dot_dimension_numbers<[1], [0], [0], [1], [0, 0, 1, 1], [], []>} : vector<8x8xf32>, vector<8x8xf32>, vector<8x8xf32> -> vector<8x8xf32>
    %cst_39 = arith.constant 0.353553385 : f32
    %48 = vector.broadcast %cst_39 : f32 to vector<8x8xf32>
    %49 = arith.mulf %47, %48 : vector<8x8xf32>
    %cst_40 = arith.constant -1.000000e+30 : f32
    %50 = vector.broadcast %cst_40 : f32 to vector<8x8xf32>
    %51 = arith.select %4, %49, %50 : vector<8x8xi1>, vector<8x8xf32>
    %cst_41 = arith.constant dense<0xFF800000> : vector<8xf32>
    %52 = vector.multi_reduction <maximumf>, %51, %cst_41 [1] : vector<8x8xf32> to vector<8xf32>
    %53 = vector.shape_cast %52 : vector<8xf32> to vector<8x1xf32>
    %54 = vector.broadcast %53 : vector<8x1xf32> to vector<8x8xf32>
    %55 = arith.subf %51, %54 : vector<8x8xf32>
    %56 = math.exp %55 : vector<8x8xf32>
    %cst_42 = arith.constant dense<0.000000e+00> : vector<8xf32>
    %57 = vector.multi_reduction <add>, %56, %cst_42 [1] : vector<8x8xf32> to vector<8xf32>
    %58 = vector.shape_cast %57 : vector<8xf32> to vector<8x1xf32>
    %59 = vector.broadcast %58 : vector<8x1xf32> to vector<8x8xf32>
    %60 = arith.divf %56, %59 : vector<8x8xf32>
    %cst_43 = arith.constant dense<0.000000e+00> : vector<8x8xf32>
    %61 = tpu.matmul %60, %45, %cst_43 {dimension_numbers = #tpu.dot_dimension_numbers<[1], [0], [0], [1], [0, 0, 1, 1], [], []>} : vector<8x8xf32>, vector<8x8xf32>, vector<8x8xf32> -> vector<8x8xf32>
    %cst_44 = arith.constant dense<0.000000e+00> : vector<8x32xf32>
    %62 = tpu.matmul %61, %42, %cst_44 {dimension_numbers = #tpu.dot_dimension_numbers<[1], [0], [0], [1], [0, 0, 1, 1], [], []>} : vector<8x8xf32>, vector<8x32xf32>, vector<8x32xf32> -> vector<8x32xf32>
    %63 = arith.addf %34, %62 : vector<8x32xf32>
    %c2 = arith.constant 2 : index
    %c0_45 = arith.constant 0 : index
    %c0_46 = arith.constant 0 : index
    %64 = vector.load %arg2[%c2, %c0_45, %c0_46] : memref<4x32x8xf32, #tpu.memory_space<vmem>>, vector<1x32x8xf32>
    %65 = vector.shape_cast %64 : vector<1x32x8xf32> to vector<32x8xf32>
    %c2_47 = arith.constant 2 : index
    %c0_48 = arith.constant 0 : index
    %c0_49 = arith.constant 0 : index
    %66 = vector.load %arg3[%c2_47, %c0_48, %c0_49] : memref<4x32x8xf32, #tpu.memory_space<vmem>>, vector<1x32x8xf32>
    %67 = vector.shape_cast %66 : vector<1x32x8xf32> to vector<32x8xf32>
    %c2_50 = arith.constant 2 : index
    %c0_51 = arith.constant 0 : index
    %c0_52 = arith.constant 0 : index
    %68 = vector.load %arg4[%c2_50, %c0_51, %c0_52] : memref<4x32x8xf32, #tpu.memory_space<vmem>>, vector<1x32x8xf32>
    %69 = vector.shape_cast %68 : vector<1x32x8xf32> to vector<32x8xf32>
    %c2_53 = arith.constant 2 : index
    %c0_54 = arith.constant 0 : index
    %c0_55 = arith.constant 0 : index
    %70 = vector.load %arg5[%c2_53, %c0_54, %c0_55] : memref<4x8x32xf32, #tpu.memory_space<vmem>>, vector<1x8x32xf32>
    %71 = vector.shape_cast %70 : vector<1x8x32xf32> to vector<8x32xf32>
    %cst_56 = arith.constant dense<0.000000e+00> : vector<8x8xf32>
    %72 = tpu.matmul %1, %65, %cst_56 {dimension_numbers = #tpu.dot_dimension_numbers<[1], [0], [0], [1], [0, 0, 1, 1], [], []>} : vector<8x32xf32>, vector<32x8xf32>, vector<8x8xf32> -> vector<8x8xf32>
    %cst_57 = arith.constant dense<0.000000e+00> : vector<8x8xf32>
    %73 = tpu.matmul %1, %67, %cst_57 {dimension_numbers = #tpu.dot_dimension_numbers<[1], [0], [0], [1], [0, 0, 1, 1], [], []>} : vector<8x32xf32>, vector<32x8xf32>, vector<8x8xf32> -> vector<8x8xf32>
    %cst_58 = arith.constant dense<0.000000e+00> : vector<8x8xf32>
    %74 = tpu.matmul %1, %69, %cst_58 {dimension_numbers = #tpu.dot_dimension_numbers<[1], [0], [0], [1], [0, 0, 1, 1], [], []>} : vector<8x32xf32>, vector<32x8xf32>, vector<8x8xf32> -> vector<8x8xf32>
    %75 = tpu.transpose %73, [1, 0] : vector<8x8xf32> -> vector<8x8xf32>
    %cst_59 = arith.constant dense<0.000000e+00> : vector<8x8xf32>
    %76 = tpu.matmul %72, %75, %cst_59 {dimension_numbers = #tpu.dot_dimension_numbers<[1], [0], [0], [1], [0, 0, 1, 1], [], []>} : vector<8x8xf32>, vector<8x8xf32>, vector<8x8xf32> -> vector<8x8xf32>
    %cst_60 = arith.constant 0.353553385 : f32
    %77 = vector.broadcast %cst_60 : f32 to vector<8x8xf32>
    %78 = arith.mulf %76, %77 : vector<8x8xf32>
    %cst_61 = arith.constant -1.000000e+30 : f32
    %79 = vector.broadcast %cst_61 : f32 to vector<8x8xf32>
    %80 = arith.select %4, %78, %79 : vector<8x8xi1>, vector<8x8xf32>
    %cst_62 = arith.constant dense<0xFF800000> : vector<8xf32>
    %81 = vector.multi_reduction <maximumf>, %80, %cst_62 [1] : vector<8x8xf32> to vector<8xf32>
    %82 = vector.shape_cast %81 : vector<8xf32> to vector<8x1xf32>
    %83 = vector.broadcast %82 : vector<8x1xf32> to vector<8x8xf32>
    %84 = arith.subf %80, %83 : vector<8x8xf32>
    %85 = math.exp %84 : vector<8x8xf32>
    %cst_63 = arith.constant dense<0.000000e+00> : vector<8xf32>
    %86 = vector.multi_reduction <add>, %85, %cst_63 [1] : vector<8x8xf32> to vector<8xf32>
    %87 = vector.shape_cast %86 : vector<8xf32> to vector<8x1xf32>
    %88 = vector.broadcast %87 : vector<8x1xf32> to vector<8x8xf32>
    %89 = arith.divf %85, %88 : vector<8x8xf32>
    %cst_64 = arith.constant dense<0.000000e+00> : vector<8x8xf32>
    %90 = tpu.matmul %89, %74, %cst_64 {dimension_numbers = #tpu.dot_dimension_numbers<[1], [0], [0], [1], [0, 0, 1, 1], [], []>} : vector<8x8xf32>, vector<8x8xf32>, vector<8x8xf32> -> vector<8x8xf32>
    %cst_65 = arith.constant dense<0.000000e+00> : vector<8x32xf32>
    %91 = tpu.matmul %90, %71, %cst_65 {dimension_numbers = #tpu.dot_dimension_numbers<[1], [0], [0], [1], [0, 0, 1, 1], [], []>} : vector<8x8xf32>, vector<8x32xf32>, vector<8x32xf32> -> vector<8x32xf32>
    %92 = arith.addf %63, %91 : vector<8x32xf32>
    %c3 = arith.constant 3 : index
    %c0_66 = arith.constant 0 : index
    %c0_67 = arith.constant 0 : index
    %93 = vector.load %arg2[%c3, %c0_66, %c0_67] : memref<4x32x8xf32, #tpu.memory_space<vmem>>, vector<1x32x8xf32>
    %94 = vector.shape_cast %93 : vector<1x32x8xf32> to vector<32x8xf32>
    %c3_68 = arith.constant 3 : index
    %c0_69 = arith.constant 0 : index
    %c0_70 = arith.constant 0 : index
    %95 = vector.load %arg3[%c3_68, %c0_69, %c0_70] : memref<4x32x8xf32, #tpu.memory_space<vmem>>, vector<1x32x8xf32>
    %96 = vector.shape_cast %95 : vector<1x32x8xf32> to vector<32x8xf32>
    %c3_71 = arith.constant 3 : index
    %c0_72 = arith.constant 0 : index
    %c0_73 = arith.constant 0 : index
    %97 = vector.load %arg4[%c3_71, %c0_72, %c0_73] : memref<4x32x8xf32, #tpu.memory_space<vmem>>, vector<1x32x8xf32>
    %98 = vector.shape_cast %97 : vector<1x32x8xf32> to vector<32x8xf32>
    %c3_74 = arith.constant 3 : index
    %c0_75 = arith.constant 0 : index
    %c0_76 = arith.constant 0 : index
    %99 = vector.load %arg5[%c3_74, %c0_75, %c0_76] : memref<4x8x32xf32, #tpu.memory_space<vmem>>, vector<1x8x32xf32>
    %100 = vector.shape_cast %99 : vector<1x8x32xf32> to vector<8x32xf32>
    %cst_77 = arith.constant dense<0.000000e+00> : vector<8x8xf32>
    %101 = tpu.matmul %1, %94, %cst_77 {dimension_numbers = #tpu.dot_dimension_numbers<[1], [0], [0], [1], [0, 0, 1, 1], [], []>} : vector<8x32xf32>, vector<32x8xf32>, vector<8x8xf32> -> vector<8x8xf32>
    %cst_78 = arith.constant dense<0.000000e+00> : vector<8x8xf32>
    %102 = tpu.matmul %1, %96, %cst_78 {dimension_numbers = #tpu.dot_dimension_numbers<[1], [0], [0], [1], [0, 0, 1, 1], [], []>} : vector<8x32xf32>, vector<32x8xf32>, vector<8x8xf32> -> vector<8x8xf32>
    %cst_79 = arith.constant dense<0.000000e+00> : vector<8x8xf32>
    %103 = tpu.matmul %1, %98, %cst_79 {dimension_numbers = #tpu.dot_dimension_numbers<[1], [0], [0], [1], [0, 0, 1, 1], [], []>} : vector<8x32xf32>, vector<32x8xf32>, vector<8x8xf32> -> vector<8x8xf32>
    %104 = tpu.transpose %102, [1, 0] : vector<8x8xf32> -> vector<8x8xf32>
    %cst_80 = arith.constant dense<0.000000e+00> : vector<8x8xf32>
    %105 = tpu.matmul %101, %104, %cst_80 {dimension_numbers = #tpu.dot_dimension_numbers<[1], [0], [0], [1], [0, 0, 1, 1], [], []>} : vector<8x8xf32>, vector<8x8xf32>, vector<8x8xf32> -> vector<8x8xf32>
    %cst_81 = arith.constant 0.353553385 : f32
    %106 = vector.broadcast %cst_81 : f32 to vector<8x8xf32>
    %107 = arith.mulf %105, %106 : vector<8x8xf32>
    %cst_82 = arith.constant -1.000000e+30 : f32
    %108 = vector.broadcast %cst_82 : f32 to vector<8x8xf32>
    %109 = arith.select %4, %107, %108 : vector<8x8xi1>, vector<8x8xf32>
    %cst_83 = arith.constant dense<0xFF800000> : vector<8xf32>
    %110 = vector.multi_reduction <maximumf>, %109, %cst_83 [1] : vector<8x8xf32> to vector<8xf32>
    %111 = vector.shape_cast %110 : vector<8xf32> to vector<8x1xf32>
    %112 = vector.broadcast %111 : vector<8x1xf32> to vector<8x8xf32>
    %113 = arith.subf %109, %112 : vector<8x8xf32>
    %114 = math.exp %113 : vector<8x8xf32>
    %cst_84 = arith.constant dense<0.000000e+00> : vector<8xf32>
    %115 = vector.multi_reduction <add>, %114, %cst_84 [1] : vector<8x8xf32> to vector<8xf32>
    %116 = vector.shape_cast %115 : vector<8xf32> to vector<8x1xf32>
    %117 = vector.broadcast %116 : vector<8x1xf32> to vector<8x8xf32>
    %118 = arith.divf %114, %117 : vector<8x8xf32>
    %cst_85 = arith.constant dense<0.000000e+00> : vector<8x8xf32>
    %119 = tpu.matmul %118, %103, %cst_85 {dimension_numbers = #tpu.dot_dimension_numbers<[1], [0], [0], [1], [0, 0, 1, 1], [], []>} : vector<8x8xf32>, vector<8x8xf32>, vector<8x8xf32> -> vector<8x8xf32>
    %cst_86 = arith.constant dense<0.000000e+00> : vector<8x32xf32>
    %120 = tpu.matmul %119, %100, %cst_86 {dimension_numbers = #tpu.dot_dimension_numbers<[1], [0], [0], [1], [0, 0, 1, 1], [], []>} : vector<8x8xf32>, vector<8x32xf32>, vector<8x32xf32> -> vector<8x32xf32>
    %121 = arith.addf %92, %120 : vector<8x32xf32>
    %c0_87 = arith.constant 0 : index
    %c0_88 = arith.constant 0 : index
    %c0_89 = arith.constant 0 : index
    %122 = vector.load %arg6[%c0_87, %c0_88, %c0_89] : memref<1x8x32xf32, #tpu.memory_space<vmem>>, vector<1x8x32xf32>
    %123 = vector.shape_cast %122 : vector<1x8x32xf32> to vector<8x32xf32>
    %124 = vector.shape_cast %121 : vector<8x32xf32> to vector<1x8x32xf32>
    tpu.vector_store %arg6[%c0_87, %c0_88, %c0_89], %124 {strides = array<i32>} : memref<1x8x32xf32, #tpu.memory_space<vmem>>, vector<1x8x32xf32>,
    return
  }
  func.func @transform_0(%arg0: i32) -> (i32, i32, i32) {
    %c0_i32 = arith.constant 0 : i32
    %c0_i32_0 = arith.constant 0 : i32
    %c0_i32_1 = arith.constant 0 : i32
    return %arg0, %c0_i32, %c0_i32_0 : i32, i32, i32
  }
  func.func @transform_1(%arg0: i32) -> (i32, i32, i32) {
    %c0_i32 = arith.constant 0 : i32
    %c0_i32_0 = arith.constant 0 : i32
    %c0_i32_1 = arith.constant 0 : i32
    %c0_i32_2 = arith.constant 0 : i32
    return %c0_i32, %c0_i32_0, %c0_i32_1 : i32, i32, i32
  }
  func.func @transform_2(%arg0: i32) -> (i32, i32, i32) {
    %c0_i32 = arith.constant 0 : i32
    %c0_i32_0 = arith.constant 0 : i32
    %c0_i32_1 = arith.constant 0 : i32
    %c0_i32_2 = arith.constant 0 : i32
    return %c0_i32, %c0_i32_0, %c0_i32_1 : i32, i32, i32
  }
  func.func @transform_3(%arg0: i32) -> (i32, i32, i32) {
    %c0_i32 = arith.constant 0 : i32
    %c0_i32_0 = arith.constant 0 : i32
    %c0_i32_1 = arith.constant 0 : i32
    %c0_i32_2 = arith.constant 0 : i32
    return %c0_i32, %c0_i32_0, %c0_i32_1 : i32, i32, i32
  }
  func.func @transform_4(%arg0: i32) -> (i32, i32, i32) {
    %c0_i32 = arith.constant 0 : i32
    %c0_i32_0 = arith.constant 0 : i32
    %c0_i32_1 = arith.constant 0 : i32
    %c0_i32_2 = arith.constant 0 : i32
    return %c0_i32, %c0_i32_0, %c0_i32_1 : i32, i32, i32
  }
  func.func @transform_5(%arg0: i32) -> (i32, i32, i32) {
    %c0_i32 = arith.constant 0 : i32
    %c0_i32_0 = arith.constant 0 : i32
    %c0_i32_1 = arith.constant 0 : i32
    return %arg0, %c0_i32, %c0_i32_0 : i32, i32, i32
  }
}

</mosaic_0001>

<llo_original>
// kernel: tpu_custom_call.1
$region0: #{tpu_custom_call.1}
  #allocation0 [shape = 'u32[]', space=smem, size = 0x4, offset = 0x4, fixed_abs, tag = 'smem constant byte address 0x4 - core index']
  #allocation1 [shape = 'u32[144,128]{1,0:T(1,128)}', space=vmem, size = 0x12000, scoped, tag = 'internal scratch']
  %s0 = inlined_call_operand.vmem [shape: f32[2,8,32], index: 0, kind: input, shape index: {}]
  %s1 = inlined_call_operand.vmem [shape: f32[4,32,8], index: 1, kind: input, shape index: {}]
  %s2 = inlined_call_operand.vmem [shape: f32[4,32,8], index: 2, kind: input, shape index: {}]
  %s3 = inlined_call_operand.vmem [shape: f32[4,32,8], index: 3, kind: input, shape index: {}]
  %s4 = inlined_call_operand.vmem [shape: f32[4,8,32], index: 4, kind: input, shape index: {}]
  %s5 = inlined_call_operand.hbm [shape: f32[2,8,32], index: 5, kind: output, shape index: {}]
  %s6 = sld [smem:[#allocation0]]
  $region53: #{tpu_custom_call.1} parent=0
    _
  %s8 = ssub.s32 1, %s6
  %s9 = scalar_select 0, %s8, %s6
  $region1: #{tpu_custom_call.1} parent=0
    #allocation2 [shape = 'u8[8192]{0}', space=vmem, size = 0x2000, scoped, tag = 'output window, operand 0']
    #allocation3 [shape = 's32[2]{0}', space=sflag, size = 0x8, scoped, tag = 'scoped memory for tpu_custom_call.1']
    %10 = vsyncpa [#allocation3], 0
    %s11 = scalar_lea.sflag [#allocation3], 1
    %12 = vsyncpa %s11, 0
    loop: start=0, step=1, limit=4
    $region2: #{tpu_custom_call.1} parent=1 // loop_pre_header
      _
    $region3: #{tpu_custom_call.1} parent=1 // loop_header
      %s14 = sphi 0, %s18
      %p15 = scmp.ge.s32.totalorder %s14, 4
      %s24 = sphi 0, %s26
      %s27 = sphi 0, %s24
      %s28 = sphi 0, %s27
      %s44 = sphi 0, %s28
      %s48 = sphi 0, %s48
      %s50 = sphi 0, %s48
      %s51 = sphi 0, %s50
      %s65 = sphi 0, %s51
      %s69 = sphi 0, %s69
      %s71 = sphi 0, %s69
      %s72 = sphi 0, %s71
      %s86 = sphi 0, %s72
      %s90 = sphi 0, %s90
      %s92 = sphi 0, %s90
      %s93 = sphi 0, %s92
      %s107 = sphi 0, %s93
      %s111 = sphi 0, %s111
      %s113 = sphi 0, %s111
      %s114 = sphi 0, %s113
      %s128 = sphi 0, %s114
      %s134 = sphi 0, %s136
      %s137 = sphi 0, %s134
      %s138 = sphi 0, %s137
      %s154 = sphi 0, %s138
    $region4: #{tpu_custom_call.1} parent=1 // loop_header_branch
      %17 = sbr.rel (%p15) target = $region8
    $region5: #{tpu_custom_call.1} parent=1 // loop_body
      %s19 = ssub.s32 %s14, 1
      %s20 = ssub.s32 %s14, 2
      %s21 = sadd.s32 %s14, 1
      %s22 = ssub.s32 %s14, %s21
      %p23 = scmp.eq.s32.totalorder %s22, 0
      %s25 = sadd.s32 %s24, 1
      %s26 = scalar_select %p23, %s24, %s25
      %p29 = pneg %p23
      %p30 = scmp.eq.s32.totalorder %s14, 1
      %p31 = por %p29, %p30
      %p32 = scmp.ne.s32.totalorder %s24, %s27
      %p33 = scmp.eq.s32.totalorder %s14, 0
      %p34 = por %p32, %p33
      %p35 = scmp.ne.s32.totalorder %s24, %s27
      %p36 = scmp.eq.s32.totalorder %s19, 1
      %p37 = por %p35, %p36
      %p38 = scmp.ne.s32.totalorder %s27, %s28
      %p39 = scmp.eq.s32.totalorder %s19, 0
      %p40 = por %p38, %p39
      %p41 = scmp.ne.s32.totalorder %s27, %s28
      %p42 = scmp.eq.s32.totalorder %s20, 1
      %p43 = por %p41, %p42
      %p45 = scmp.ne.s32.totalorder %s28, %s44
      %p46 = scmp.eq.s32.totalorder %s20, 0
      %p47 = por %p45, %p46
      %s49 = sadd.s32 %s48, 1
      %p52 = scmp.eq.s32.totalorder %s14, 1
      %p53 = scmp.ne.s32.totalorder %s48, %s50
      %p54 = scmp.eq.s32.totalorder %s14, 0
      %p55 = por %p53, %p54
      %p56 = scmp.ne.s32.totalorder %s48, %s50
      %p57 = scmp.eq.s32.totalorder %s19, 1
      %p58 = por %p56, %p57
      %p59 = scmp.ne.s32.totalorder %s50, %s51
      %p60 = scmp.eq.s32.totalorder %s19, 0
      %p61 = por %p59, %p60
      %p62 = scmp.ne.s32.totalorder %s50, %s51
      %p63 = scmp.eq.s32.totalorder %s20, 1
      %p64 = por %p62, %p63
      %p66 = scmp.ne.s32.totalorder %s51, %s65
      %p67 = scmp.eq.s32.totalorder %s20, 0
      %p68 = por %p66, %p67
      %s70 = sadd.s32 %s69, 1
      %p73 = scmp.eq.s32.totalorder %s14, 1
      %p74 = scmp.ne.s32.totalorder %s69, %s71
      %p75 = scmp.eq.s32.totalorder %s14, 0
      %p76 = por %p74, %p75
      %p77 = scmp.ne.s32.totalorder %s69, %s71
      %p78 = scmp.eq.s32.totalorder %s19, 1
      %p79 = por %p77, %p78
      %p80 = scmp.ne.s32.totalorder %s71, %s72
      %p81 = scmp.eq.s32.totalorder %s19, 0
      %p82 = por %p80, %p81
      %p83 = scmp.ne.s32.totalorder %s71, %s72
      %p84 = scmp.eq.s32.totalorder %s20, 1
      %p85 = por %p83, %p84
      %p87 = scmp.ne.s32.totalorder %s72, %s86
      %p88 = scmp.eq.s32.totalorder %s20, 0
      %p89 = por %p87, %p88
      %s91 = sadd.s32 %s90, 1
      %p94 = scmp.eq.s32.totalorder %s14, 1
      %p95 = scmp.ne.s32.totalorder %s90, %s92
      %p96 = scmp.eq.s32.totalorder %s14, 0
      %p97 = por %p95, %p96
      %p98 = scmp.ne.s32.totalorder %s90, %s92
      %p99 = scmp.eq.s32.totalorder %s19, 1
      %p100 = por %p98, %p99
      %p101 = scmp.ne.s32.totalorder %s92, %s93
      %p102 = scmp.eq.s32.totalorder %s19, 0
      %p103 = por %p101, %p102
      %p104 = scmp.ne.s32.totalorder %s92, %s93
      %p105 = scmp.eq.s32.totalorder %s20, 1
      %p106 = por %p104, %p105
      %p108 = scmp.ne.s32.totalorder %s93, %s107
      %p109 = scmp.eq.s32.totalorder %s20, 0
      %p110 = por %p108, %p109
      %s112 = sadd.s32 %s111, 1
      %p115 = scmp.eq.s32.totalorder %s14, 1
      %p116 = scmp.ne.s32.totalorder %s111, %s113
      %p117 = scmp.eq.s32.totalorder %s14, 0
      %p118 = por %p116, %p117
      %p119 = scmp.ne.s32.totalorder %s111, %s113
      %p120 = scmp.eq.s32.totalorder %s19, 1
      %p121 = por %p119, %p120
      %p122 = scmp.ne.s32.totalorder %s113, %s114
      %p123 = scmp.eq.s32.totalorder %s19, 0
      %p124 = por %p122, %p123
      %p125 = scmp.ne.s32.totalorder %s113, %s114
      %p126 = scmp.eq.s32.totalorder %s20, 1
      %p127 = por %p125, %p126
      %p129 = scmp.ne.s32.totalorder %s114, %s128
      %p130 = scmp.eq.s32.totalorder %s20, 0
      %p131 = por %p129, %p130
      %s132 = ssub.s32 %s14, %s21
      %p133 = scmp.eq.s32.totalorder %s132, 0
      %s135 = sadd.s32 %s134, 1
      %s136 = scalar_select %p133, %s134, %s135
      %p139 = pneg %p133
      %p140 = scmp.eq.s32.totalorder %s14, 1
      %p141 = por %p139, %p140
      %p142 = scmp.ne.s32.totalorder %s134, %s137
      %p143 = scmp.eq.s32.totalorder %s14, 0
      %p144 = por %p142, %p143
      %p145 = scmp.ne.s32.totalorder %s134, %s137
      %p146 = scmp.eq.s32.totalorder %s19, 1
      %p147 = por %p145, %p146
      %p148 = scmp.ne.s32.totalorder %s137, %s138
      %p149 = scmp.eq.s32.totalorder %s19, 0
      %p150 = por %p148, %p149
      %p151 = scmp.ne.s32.totalorder %s137, %s138
      %p152 = scmp.eq.s32.totalorder %s20, 1
      %p153 = por %p151, %p152
      %p155 = scmp.ne.s32.totalorder %s138, %s154
      %p156 = scmp.eq.s32.totalorder %s20, 0
      %p157 = por %p155, %p156
      %p158 = scmp.le.s32.totalorder 1, %s14
      %p159 = scmp.lt.s32.totalorder %s14, 3
      %p160 = pnand %p158, %p159
      %p161 = pneg %p160
      // Predicated region
      $region9: #{tpu_custom_call.1} parent=5 // pred_check
        _
      $region10: #{tpu_custom_call.1} parent=5 // pred_check_branch
        %163 = sbr.rel (%p160) target = $region12
      $region11: #{tpu_custom_call.1} parent=5 // pred_region
        %s164 = ssub.s32 %s14, 1
        // Predicated region
        $region13: #{tpu_custom_call.1} parent=11 // pred_check
          %p165 = pneg %p61
        $region14: #{tpu_custom_call.1} parent=11 // pred_check_branch
          %167 = sbr.rel (%p165) target = $region16
        $region15: #{tpu_custom_call.1} parent=11 // pred_region
          _
        $region16: #{tpu_custom_call.1} parent=11 // pred_fallthru
          _
        // Predicated region
        $region17: #{tpu_custom_call.1} parent=11 // pred_check
          %p168 = pneg %p82
        $region18: #{tpu_custom_call.1} parent=11 // pred_check_branch
          %170 = sbr.rel (%p168) target = $region20
        $region19: #{tpu_custom_call.1} parent=11 // pred_region
          _
        $region20: #{tpu_custom_call.1} parent=11 // pred_fallthru
          _
        // Predicated region
        $region21: #{tpu_custom_call.1} parent=11 // pred_check
          %p171 = pneg %p103
        $region22: #{tpu_custom_call.1} parent=11 // pred_check_branch
          %173 = sbr.rel (%p171) target = $region24
        $region23: #{tpu_custom_call.1} parent=11 // pred_region
          _
        $region24: #{tpu_custom_call.1} parent=11 // pred_fallthru
          _
        // Predicated region
        $region25: #{tpu_custom_call.1} parent=11 // pred_check
          %p174 = pneg %p124
        $region26: #{tpu_custom_call.1} parent=11 // pred_check_branch
          %176 = sbr.rel (%p174) target = $region28
        $region27: #{tpu_custom_call.1} parent=11 // pred_region
          _
        $region28: #{tpu_custom_call.1} parent=11 // pred_fallthru
          _
      $region12: #{tpu_custom_call.1} parent=5 // pred_fallthru
        _
      %p177 = scmp.lt.s32.totalorder %s14, 2
      // Predicated region
      $region29: #{tpu_custom_call.1} parent=5 // pred_check
        %p178 = pneg %p177
      $region30: #{tpu_custom_call.1} parent=5 // pred_check_branch
        %180 = sbr.rel (%p178) target = $region32
      $region31: #{tpu_custom_call.1} parent=5 // pred_region
        // Predicated region
        $region33: #{tpu_custom_call.1} parent=31 // pred_check
          %p181 = pneg %p34
        $region34: #{tpu_custom_call.1} parent=31 // pred_check_branch
          %183 = sbr.rel (%p181) target = $region36
        $region35: #{tpu_custom_call.1} parent=31 // pred_region
          %p184 = scmp.lt.s32.totalorder %s14, 1
          %s185 = scalar_select %p184, %s14, 1
          %s186 = smul.addr %s185, 8
          %s187 = scalar_lea.vmem %s0, %s186
        $region36: #{tpu_custom_call.1} parent=31 // pred_fallthru
          _
      $region32: #{tpu_custom_call.1} parent=5 // pred_fallthru
        _
      %p188 = scmp.le.s32.totalorder 1, %s14
      %p189 = scmp.lt.s32.totalorder %s14, 3
      %p190 = pnand %p188, %p189
      %p191 = pneg %p190
      // Predicated region
      $region37: #{tpu_custom_call.1} parent=5 // pred_check
        _
      $region38: #{tpu_custom_call.1} parent=5 // pred_check_branch
        %193 = sbr.rel (%p190) target = $region40
      $region39: #{tpu_custom_call.1} parent=5 // pred_region
        %s194 = ssub.s32 %s14, 1
        %p195 = scmp.lt.s32.totalorder %s19, 1
        %s196 = scalar_select %p195, %s19, 1
        %s197 = smul.addr %s196, 8
        %s198 = scalar_lea.vmem %s0, %s197
        %p199 = pneg %p40
        %p200 = pneg %p37
        %p201 = pneg %p61
        %p202 = pneg %p58
        %p203 = pneg %p82
        %p204 = pneg %p79
        %p205 = pneg %p103
        %p206 = pneg %p100
        %p207 = pneg %p124
        %p208 = pneg %p121
        %p209 = pneg %p150
        %p210 = pneg %p147
        %s211 = sand.u32 %s137, 1
        %s212 = scalar_lea.sflag [#allocation3], %s211
        %s213 = sand.u32 %s137, 1
        %s214 = smul.addr %s213, 8
        %s215 = scalar_lea.vmem [#allocation2], %s214
        %p216 = scmp.lt.s32.totalorder %s19, 1
        %s217 = scalar_select %p216, %s19, 1
        %s218 = smul.addr %s217, 8
        %s219 = scalar_lea.vmem %s0, %s218
        %v220 = vld [vmem:[%s219] sm:$0xff]
        %v221 = vlaneseq
        %v222 = vshrl.u32 %v221, 7
        %v223 = vlaneseq
        %v224 = vand.u32 %v223, 127
        %vm225 = vcmp.ge.s32.totalorder %v222, %v224
        %v226 = vld [vmem:[%s1] sm:$0xff]
        %v227 = vld [vmem:[%s1 + $0x8] sm:$0xff]
        %v228 = vld [vmem:[%s1 + $0x10] sm:$0xff]
        %v229 = vld [vmem:[%s1 + $0x18] sm:$0xff]
        %v230 = vld [vmem:[%s2] sm:$0xff]
        %v231 = vld [vmem:[%s2 + $0x8] sm:$0xff]
        %v232 = vld [vmem:[%s2 + $0x10] sm:$0xff]
        %v233 = vld [vmem:[%s2 + $0x18] sm:$0xff]
        %v234 = vld [vmem:[%s3] sm:$0xff]
        %v235 = vld [vmem:[%s3 + $0x8] sm:$0xff]
        %v236 = vld [vmem:[%s3 + $0x10] sm:$0xff]
        %v237 = vld [vmem:[%s3 + $0x18] sm:$0xff]
        %v238 = vld [vmem:[%s4] sm:$0xff]
        %vm239 = vcmask 261120
        %v241 = vsel %vm239, %v220, 0
        %243 = vmatprep.subr.mxu0 0.0
        %244 = vmatpush1.msra.mxu0 0.0
        %245 = vmatprep.subr.mxu0 0.0
        %246 = vmatpush1.msra.mxu0 0.0
        %247 = vmatprep.subr.mxu0 0.0
        %248 = vmatpush1.msra.mxu0 0.0
        %249 = vmatprep.subr.mxu0 0.0
        %250 = vmatpush1.msra.mxu0 0.0
        %251 = vmatprep.subr.mxu0 0.0
        %252 = vmatpush1.msra.mxu0 0.0
        %253 = vmatprep.subr.mxu0 0.0
        %254 = vmatpush1.msra.mxu0 0.0
        %255 = vmatprep.subr.mxu0 0.0
        %256 = vmatpush1.msra.mxu0 0.0
        %257 = vmatprep.subr.mxu0 0.0
        %258 = vmatpush1.msra.mxu0 0.0
        %259 = vmatprep.subr.mxu0 0.0
        %260 = vmatpush1.msra.mxu0 0.0
        %261 = vmatprep.subr.mxu0 0.0
        %262 = vmatpush1.msra.mxu0 0.0
        %263 = vmatprep.subr.mxu0 0.0
        %264 = vmatpush1.msra.mxu0 0.0
        %265 = vmatprep.subr.mxu0 0.0
        %266 = vmatpush1.msra.mxu0 0.0
        %267 = vmatprep.subr.mxu0 0.0
        %268 = vmatpush1.msra.mxu0 %v229
        %269 = vmatprep.subr.mxu0 0.0
        %270 = vmatpush1.msra.mxu0 %v228
        %271 = vmatprep.subr.mxu0 0.0
        %272 = vmatpush1.msra.mxu0 %v227
        %273 = vmatprep.subr.mxu0 0.0
        %274 = vmatpush1.msra.mxu0 %v226
        %275 = vmatprep.subr.mxu0 0.0
        %276 = vmatpush2.msra.mxu0 0.0
        %277 = vmatprep.subr.mxu0 0.0
        %278 = vmatpush2.msra.mxu0 0.0
        %279 = vmatprep.subr.mxu0 0.0
        %280 = vmatpush2.msra.mxu0 0.0
        %281 = vmatprep.subr.mxu0 0.0
        %282 = vmatpush2.msra.mxu0 0.0
        %283 = vmatprep.subr.mxu0 0.0
        %284 = vmatpush2.msra.mxu0 0.0
        %285 = vmatprep.subr.mxu0 0.0
        %286 = vmatpush2.msra.mxu0 0.0
        %287 = vmatprep.subr.mxu0 0.0
        %288 = vmatpush2.msra.mxu0 0.0
        %289 = vmatprep.subr.mxu0 0.0
        %290 = vmatpush2.msra.mxu0 0.0
        %291 = vmatprep.subr.mxu0 0.0
        %292 = vmatpush2.msra.mxu0 0.0
        %293 = vmatprep.subr.mxu0 0.0
        %294 = vmatpush2.msra.mxu0 0.0
        %295 = vmatprep.subr.mxu0 0.0
        %296 = vmatpush2.msra.mxu0 0.0
        %297 = vmatprep.subr.mxu0 0.0
        %298 = vmatpush2.msra.mxu0 0.0
        %299 = vmatprep.subr.mxu0 0.0
        %300 = vmatpush2.msra.mxu0 0.0
        %301 = vmatprep.subr.mxu0 0.0
        %302 = vmatpush2.msra.mxu0 0.0
        %303 = vmatprep.subr.mxu0 0.0
        %304 = vmatpush2.msra.mxu0 0.0
        %305 = vmatprep.subr.mxu0 0.0
        %306 = vmatpush2.msra.mxu0 0.0
        %307 = vmatprep.mubr.f32.mxu0 0.0
        %308 = vmatmul.mubr.f32.gmra.mxu0 %v241
        %v309 = vpop.f32.mrf.mxu0
        %v310 = vadd.f32 0.0, %v309
        %v311 = vpop.f32.mrf.mxu0
        %312 = vdwg.mxu0
        %313 = vmatprep.subr.mxu0 0.0
        %314 = vmatpush1.msra.mxu0 0.0
        %315 = vmatprep.subr.mxu0 0.0
        %316 = vmatpush1.msra.mxu0 0.0
        %317 = vmatprep.subr.mxu0 0.0
        %318 = vmatpush1.msra.mxu0 0.0
        %319 = vmatprep.subr.mxu0 0.0
        %320 = vmatpush1.msra.mxu0 0.0
        %321 = vmatprep.subr.mxu0 0.0
        %322 = vmatpush1.msra.mxu0 0.0
        %323 = vmatprep.subr.mxu0 0.0
        %324 = vmatpush1.msra.mxu0 0.0
        %325 = vmatprep.subr.mxu0 0.0
        %326 = vmatpush1.msra.mxu0 0.0
        %327 = vmatprep.subr.mxu0 0.0
        %328 = vmatpush1.msra.mxu0 0.0
        %329 = vmatprep.subr.mxu0 0.0
        %330 = vmatpush1.msra.mxu0 0.0
        %331 = vmatprep.subr.mxu0 0.0
        %332 = vmatpush1.msra.mxu0 0.0
        %333 = vmatprep.subr.mxu0 0.0
        %334 = vmatpush1.msra.mxu0 0.0
        %335 = vmatprep.subr.mxu0 0.0
        %336 = vmatpush1.msra.mxu0 0.0
        %337 = vmatprep.subr.mxu0 0.0
        %338 = vmatpush1.msra.mxu0 %v233
        %339 = vmatprep.subr.mxu0 0.0
        %340 = vmatpush1.msra.mxu0 %v232
        %341 = vmatprep.subr.mxu0 0.0
        %342 = vmatpush1.msra.mxu0 %v231
        %343 = vmatprep.subr.mxu0 0.0
        %344 = vmatpush1.msra.mxu0 %v230
        %345 = vmatprep.subr.mxu0 0.0
        %346 = vmatpush2.msra.mxu0 0.0
        %347 = vmatprep.subr.mxu0 0.0
        %348 = vmatpush2.msra.mxu0 0.0
        %349 = vmatprep.subr.mxu0 0.0
        %350 = vmatpush2.msra.mxu0 0.0
        %351 = vmatprep.subr.mxu0 0.0
        %352 = vmatpush2.msra.mxu0 0.0
        %353 = vmatprep.subr.mxu0 0.0
        %354 = vmatpush2.msra.mxu0 0.0
        %355 = vmatprep.subr.mxu0 0.0
        %356 = vmatpush2.msra.mxu0 0.0
        %357 = vmatprep.subr.mxu0 0.0
        %358 = vmatpush2.msra.mxu0 0.0
        %359 = vmatprep.subr.mxu0 0.0
        %360 = vmatpush2.msra.mxu0 0.0
        %361 = vmatprep.subr.mxu0 0.0
        %362 = vmatpush2.msra.mxu0 0.0
        %363 = vmatprep.subr.mxu0 0.0
        %364 = vmatpush2.msra.mxu0 0.0
        %365 = vmatprep.subr.mxu0 0.0
        %366 = vmatpush2.msra.mxu0 0.0
        %367 = vmatprep.subr.mxu0 0.0
        %368 = vmatpush2.msra.mxu0 0.0
        %369 = vmatprep.subr.mxu0 0.0
        %370 = vmatpush2.msra.mxu0 0.0
        %371 = vmatprep.subr.mxu0 0.0
        %372 = vmatpush2.msra.mxu0 0.0
        %373 = vmatprep.subr.mxu0 0.0
        %374 = vmatpush2.msra.mxu0 0.0
        %375 = vmatprep.subr.mxu0 0.0
        %376 = vmatpush2.msra.mxu0 0.0
        %377 = vmatprep.mubr.f32.mxu0 0.0
        %378 = vmatmul.mubr.f32.gmra.mxu0 %v241
        %v379 = vpop.f32.mrf.mxu0
        %v380 = vadd.f32 0.0, %v379
        %v381 = vpop.f32.mrf.mxu0
        %382 = vdwg.mxu0
        %383 = vmatprep.subr.mxu0 0.0
        %384 = vmatpush1.msra.mxu0 0.0
        %385 = vmatprep.subr.mxu0 0.0
        %386 = vmatpush1.msra.mxu0 0.0
        %387 = vmatprep.subr.mxu0 0.0
        %388 = vmatpush1.msra.mxu0 0.0
        %389 = vmatprep.subr.mxu0 0.0
        %390 = vmatpush1.msra.mxu0 0.0
        %391 = vmatprep.subr.mxu0 0.0
        %392 = vmatpush1.msra.mxu0 0.0
        %393 = vmatprep.subr.mxu0 0.0
        %394 = vmatpush1.msra.mxu0 0.0
        %395 = vmatprep.subr.mxu0 0.0
        %396 = vmatpush1.msra.mxu0 0.0
        %397 = vmatprep.subr.mxu0 0.0
        %398 = vmatpush1.msra.mxu0 0.0
        %399 = vmatprep.subr.mxu0 0.0
        %400 = vmatpush1.msra.mxu0 0.0
        %401 = vmatprep.subr.mxu0 0.0
        %402 = vmatpush1.msra.mxu0 0.0
        %403 = vmatprep.subr.mxu0 0.0
        %404 = vmatpush1.msra.mxu0 0.0
        %405 = vmatprep.subr.mxu0 0.0
        %406 = vmatpush1.msra.mxu0 0.0
        %407 = vmatprep.subr.mxu0 0.0
        %408 = vmatpush1.msra.mxu0 %v237
        %409 = vmatprep.subr.mxu0 0.0
        %410 = vmatpush1.msra.mxu0 %v236
        %411 = vmatprep.subr.mxu0 0.0
        %412 = vmatpush1.msra.mxu0 %v235
        %413 = vmatprep.subr.mxu0 0.0
        %414 = vmatpush1.msra.mxu0 %v234
        %415 = vmatprep.subr.mxu0 0.0
        %416 = vmatpush2.msra.mxu0 0.0
        %417 = vmatprep.subr.mxu0 0.0
        %418 = vmatpush2.msra.mxu0 0.0
        %419 = vmatprep.subr.mxu0 0.0
        %420 = vmatpush2.msra.mxu0 0.0
        %421 = vmatprep.subr.mxu0 0.0
        %422 = vmatpush2.msra.mxu0 0.0
        %423 = vmatprep.subr.mxu0 0.0
        %424 = vmatpush2.msra.mxu0 0.0
        %425 = vmatprep.subr.mxu0 0.0
        %426 = vmatpush2.msra.mxu0 0.0
        %427 = vmatprep.subr.mxu0 0.0
        %428 = vmatpush2.msra.mxu0 0.0
        %429 = vmatprep.subr.mxu0 0.0
        %430 = vmatpush2.msra.mxu0 0.0
        %431 = vmatprep.subr.mxu0 0.0
        %432 = vmatpush2.msra.mxu0 0.0
        %433 = vmatprep.subr.mxu0 0.0
        %434 = vmatpush2.msra.mxu0 0.0
        %435 = vmatprep.subr.mxu0 0.0
        %436 = vmatpush2.msra.mxu0 0.0
        %437 = vmatprep.subr.mxu0 0.0
        %438 = vmatpush2.msra.mxu0 0.0
        %439 = vmatprep.subr.mxu0 0.0
        %440 = vmatpush2.msra.mxu0 0.0
        %441 = vmatprep.subr.mxu0 0.0
        %442 = vmatpush2.msra.mxu0 0.0
        %443 = vmatprep.subr.mxu0 0.0
        %444 = vmatpush2.msra.mxu0 0.0
        %445 = vmatprep.subr.mxu0 0.0
        %446 = vmatpush2.msra.mxu0 0.0
        %447 = vmatprep.mubr.f32.mxu0 0.0
        %448 = vmatmul.mubr.f32.gmra.mxu0 %v241
        %v449 = vpop.f32.mrf.mxu0
        %v450 = vadd.f32 0.0, %v449
        %v451 = vpop.f32.mrf.mxu0
        %452 = vdwg.mxu0
        %vm453 = vcmask 64512
        %v455 = vsel %vm453, %v310, 0
        %v458 = vsel %vm453, %v380, 0
        %460 = vmatprep.subr.mxu0 0.0
        %461 = vmatpush1.xpose.msra.mxu0 0.0
        %462 = vmatprep.subr.mxu0 0.0
        %463 = vmatpush1.xpose.msra.mxu0 0.0
        %464 = vmatprep.subr.mxu0 0.0
        %465 = vmatpush1.xpose.msra.mxu0 0.0
        %466 = vmatprep.subr.mxu0 0.0
        %467 = vmatpush1.xpose.msra.mxu0 0.0
        %468 = vmatprep.subr.mxu0 0.0
        %469 = vmatpush1.xpose.msra.mxu0 0.0
        %470 = vmatprep.subr.mxu0 0.0
        %471 = vmatpush1.xpose.msra.mxu0 0.0
        %472 = vmatprep.subr.mxu0 0.0
        %473 = vmatpush1.xpose.msra.mxu0 0.0
        %474 = vmatprep.subr.mxu0 0.0
        %475 = vmatpush1.xpose.msra.mxu0 0.0
        %476 = vmatprep.subr.mxu0 0.0
        %477 = vmatpush1.xpose.msra.mxu0 0.0
        %478 = vmatprep.subr.mxu0 0.0
        %479 = vmatpush1.xpose.msra.mxu0 0.0
        %480 = vmatprep.subr.mxu0 0.0
        %481 = vmatpush1.xpose.msra.mxu0 0.0
        %482 = vmatprep.subr.mxu0 0.0
        %483 = vmatpush1.xpose.msra.mxu0 0.0
        %484 = vmatprep.subr.mxu0 0.0
        %485 = vmatpush1.xpose.msra.mxu0 0.0
        %486 = vmatprep.subr.mxu0 0.0
        %487 = vmatpush1.xpose.msra.mxu0 0.0
        %488 = vmatprep.subr.mxu0 0.0
        %489 = vmatpush1.xpose.msra.mxu0 0.0
        %490 = vmatprep.subr.mxu0 0.0
        %491 = vmatpush1.xpose.msra.mxu0 %v458
        %492 = vmatprep.subr.mxu0 0.0
        %493 = vmatpush2.xpose.msra.mxu0 0.0
        %494 = vmatprep.subr.mxu0 0.0
        %495 = vmatpush2.xpose.msra.mxu0 0.0
        %496 = vmatprep.subr.mxu0 0.0
        %497 = vmatpush2.xpose.msra.mxu0 0.0
        %498 = vmatprep.subr.mxu0 0.0
        %499 = vmatpush2.xpose.msra.mxu0 0.0
        %500 = vmatprep.subr.mxu0 0.0
        %501 = vmatpush2.xpose.msra.mxu0 0.0
        %502 = vmatprep.subr.mxu0 0.0
        %503 = vmatpush2.xpose.msra.mxu0 0.0
        %504 = vmatprep.subr.mxu0 0.0
        %505 = vmatpush2.xpose.msra.mxu0 0.0
        %506 = vmatprep.subr.mxu0 0.0
        %507 = vmatpush2.xpose.msra.mxu0 0.0
        %508 = vmatprep.subr.mxu0 0.0
        %509 = vmatpush2.xpose.msra.mxu0 0.0
        %510 = vmatprep.subr.mxu0 0.0
        %511 = vmatpush2.xpose.msra.mxu0 0.0
        %512 = vmatprep.subr.mxu0 0.0
        %513 = vmatpush2.xpose.msra.mxu0 0.0
        %514 = vmatprep.subr.mxu0 0.0
        %515 = vmatpush2.xpose.msra.mxu0 0.0
        %516 = vmatprep.subr.mxu0 0.0
        %517 = vmatpush2.xpose.msra.mxu0 0.0
        %518 = vmatprep.subr.mxu0 0.0
        %519 = vmatpush2.xpose.msra.mxu0 0.0
        %520 = vmatprep.subr.mxu0 0.0
        %521 = vmatpush2.xpose.msra.mxu0 0.0
        %522 = vmatprep.subr.mxu0 0.0
        %523 = vmatpush2.xpose.msra.mxu0 0.0
        %524 = vmatprep.mubr.f32.mxu0 0.0
        %525 = vmatmul.mubr.f32.gmra.mxu0 %v455
        %v526 = vpop.f32.mrf.mxu0
        %v527 = vadd.f32 0.0, %v526
        %v528 = vpop.f32.mrf.mxu0
        %529 = vdwg.mxu0
        %v530 = vmul.f32 %v527, 0.35355338
        %v531 = vsel %vm225, %v530, -1e+30
        %v532 = vsel %vm453, %v531, -inf
        %533 = vmax.xlane.f32.xlu0 %v532
        %v534 = vpop.xlane.xlu0 %533
        %v535 = vsub.f32 %v531, %v534
        %v536 = vmul.f32 %v535, 1.442695
        %v537 = vpow.pop %v536
        %v538 = vsel %vm453, %v537, 0.0
        %539 = vadd.xlane.f32.xlu0 %v538
        %v540 = vpop.xlane.xlu0 %539
        %v541 = vrcp.pop %v540
        %v542 = vmul.f32 %v537, %v541
        %v544 = vsel %vm453, %v542, 0
        %546 = vmatprep.subr.mxu0 0.0
        %547 = vmatpush1.msra.mxu0 0.0
        %548 = vmatprep.subr.mxu0 0.0
        %549 = vmatpush1.msra.mxu0 0.0
        %550 = vmatprep.subr.mxu0 0.0
        %551 = vmatpush1.msra.mxu0 0.0
        %552 = vmatprep.subr.mxu0 0.0
        %553 = vmatpush1.msra.mxu0 0.0
        %554 = vmatprep.subr.mxu0 0.0
        %555 = vmatpush1.msra.mxu0 0.0
        %556 = vmatprep.subr.mxu0 0.0
        %557 = vmatpush1.msra.mxu0 0.0
        %558 = vmatprep.subr.mxu0 0.0
        %559 = vmatpush1.msra.mxu0 0.0
        %560 = vmatprep.subr.mxu0 0.0
        %561 = vmatpush1.msra.mxu0 0.0
        %562 = vmatprep.subr.mxu0 0.0
        %563 = vmatpush1.msra.mxu0 0.0
        %564 = vmatprep.subr.mxu0 0.0
        %565 = vmatpush1.msra.mxu0 0.0
        %566 = vmatprep.subr.mxu0 0.0
        %567 = vmatpush1.msra.mxu0 0.0
        %568 = vmatprep.subr.mxu0 0.0
        %569 = vmatpush1.msra.mxu0 0.0
        %570 = vmatprep.subr.mxu0 0.0
        %571 = vmatpush1.msra.mxu0 0.0
        %572 = vmatprep.subr.mxu0 0.0
        %573 = vmatpush1.msra.mxu0 0.0
        %574 = vmatprep.subr.mxu0 0.0
        %575 = vmatpush1.msra.mxu0 0.0
        %576 = vmatprep.subr.mxu0 0.0
        %577 = vmatpush1.msra.mxu0 %v450
        %578 = vmatprep.subr.mxu0 0.0
        %579 = vmatpush2.msra.mxu0 0.0
        %580 = vmatprep.subr.mxu0 0.0
        %581 = vmatpush2.msra.mxu0 0.0
        %582 = vmatprep.subr.mxu0 0.0
        %583 = vmatpush2.msra.mxu0 0.0
        %584 = vmatprep.subr.mxu0 0.0
        %585 = vmatpush2.msra.mxu0 0.0
        %586 = vmatprep.subr.mxu0 0.0
        %587 = vmatpush2.msra.mxu0 0.0
        %588 = vmatprep.subr.mxu0 0.0
        %589 = vmatpush2.msra.mxu0 0.0
        %590 = vmatprep.subr.mxu0 0.0
        %591 = vmatpush2.msra.mxu0 0.0
        %592 = vmatprep.subr.mxu0 0.0
        %593 = vmatpush2.msra.mxu0 0.0
        %594 = vmatprep.subr.mxu0 0.0
        %595 = vmatpush2.msra.mxu0 0.0
        %596 = vmatprep.subr.mxu0 0.0
        %597 = vmatpush2.msra.mxu0 0.0
        %598 = vmatprep.subr.mxu0 0.0
        %599 = vmatpush2.msra.mxu0 0.0
        %600 = vmatprep.subr.mxu0 0.0
        %601 = vmatpush2.msra.mxu0 0.0
        %602 = vmatprep.subr.mxu0 0.0
        %603 = vmatpush2.msra.mxu0 0.0
        %604 = vmatprep.subr.mxu0 0.0
        %605 = vmatpush2.msra.mxu0 0.0
        %606 = vmatprep.subr.mxu0 0.0
        %607 = vmatpush2.msra.mxu0 0.0
        %608 = vmatprep.subr.mxu0 0.0
        %609 = vmatpush2.msra.mxu0 0.0
        %610 = vmatprep.mubr.f32.mxu0 0.0
        %611 = vmatmul.mubr.f32.gmra.mxu0 %v544
        %v612 = vpop.f32.mrf.mxu0
        %v613 = vadd.f32 0.0, %v612
        %v614 = vpop.f32.mrf.mxu0
        %615 = vdwg.mxu0
        %s616 = scalar_lea.vmem %s1, 32
        %v617 = vld [vmem:[%s616] sm:$0xff]
        %v618 = vld [vmem:[%s616 + $0x8] sm:$0xff]
        %v619 = vld [vmem:[%s616 + $0x10] sm:$0xff]
        %v620 = vld [vmem:[%s616 + $0x18] sm:$0xff]
        %s621 = scalar_lea.vmem %s2, 32
        %v622 = vld [vmem:[%s621] sm:$0xff]
        %v623 = vld [vmem:[%s621 + $0x8] sm:$0xff]
        %v624 = vld [vmem:[%s621 + $0x10] sm:$0xff]
        %v625 = vld [vmem:[%s621 + $0x18] sm:$0xff]
        %s626 = scalar_lea.vmem %s3, 32
        %v627 = vld [vmem:[%s626] sm:$0xff]
        %v628 = vld [vmem:[%s626 + $0x8] sm:$0xff]
        %v629 = vld [vmem:[%s626 + $0x10] sm:$0xff]
        %v630 = vld [vmem:[%s626 + $0x18] sm:$0xff]
        %s631 = scalar_lea.vmem %s4, 8
        %v632 = vld [vmem:[%s631] sm:$0xff]
        %633 = vmatprep.subr.mxu0 0.0
        %634 = vmatpush1.msra.mxu0 0.0
        %635 = vmatprep.subr.mxu0 0.0
        %636 = vmatpush1.msra.mxu0 0.0
        %637 = vmatprep.subr.mxu0 0.0
        %638 = vmatpush1.msra.mxu0 0.0
        %639 = vmatprep.subr.mxu0 0.0
        %640 = vmatpush1.msra.mxu0 0.0
        %641 = vmatprep.subr.mxu0 0.0
        %642 = vmatpush1.msra.mxu0 0.0
        %643 = vmatprep.subr.mxu0 0.0
        %644 = vmatpush1.msra.mxu0 0.0
        %645 = vmatprep.subr.mxu0 0.0
        %646 = vmatpush1.msra.mxu0 0.0
        %647 = vmatprep.subr.mxu0 0.0
        %648 = vmatpush1.msra.mxu0 0.0
        %649 = vmatprep.subr.mxu0 0.0
        %650 = vmatpush1.msra.mxu0 0.0
        %651 = vmatprep.subr.mxu0 0.0
        %652 = vmatpush1.msra.mxu0 0.0
        %653 = vmatprep.subr.mxu0 0.0
        %654 = vmatpush1.msra.mxu0 0.0
        %655 = vmatprep.subr.mxu0 0.0
        %656 = vmatpush1.msra.mxu0 0.0
        %657 = vmatprep.subr.mxu0 0.0
        %658 = vmatpush1.msra.mxu0 %v620
        %659 = vmatprep.subr.mxu0 0.0
        %660 = vmatpush1.msra.mxu0 %v619
        %661 = vmatprep.subr.mxu0 0.0
        %662 = vmatpush1.msra.mxu0 %v618
        %663 = vmatprep.subr.mxu0 0.0
        %664 = vmatpush1.msra.mxu0 %v617
        %665 = vmatprep.subr.mxu0 0.0
        %666 = vmatpush2.msra.mxu0 0.0
        %667 = vmatprep.subr.mxu0 0.0
        %668 = vmatpush2.msra.mxu0 0.0
        %669 = vmatprep.subr.mxu0 0.0
        %670 = vmatpush2.msra.mxu0 0.0
        %671 = vmatprep.subr.mxu0 0.0
        %672 = vmatpush2.msra.mxu0 0.0
        %673 = vmatprep.subr.mxu0 0.0
        %674 = vmatpush2.msra.mxu0 0.0
        %675 = vmatprep.subr.mxu0 0.0
        %676 = vmatpush2.msra.mxu0 0.0
        %677 = vmatprep.subr.mxu0 0.0
        %678 = vmatpush2.msra.mxu0 0.0
        %679 = vmatprep.subr.mxu0 0.0
        %680 = vmatpush2.msra.mxu0 0.0
        %681 = vmatprep.subr.mxu0 0.0
        %682 = vmatpush2.msra.mxu0 0.0
        %683 = vmatprep.subr.mxu0 0.0
        %684 = vmatpush2.msra.mxu0 0.0
        %685 = vmatprep.subr.mxu0 0.0
        %686 = vmatpush2.msra.mxu0 0.0
        %687 = vmatprep.subr.mxu0 0.0
        %688 = vmatpush2.msra.mxu0 0.0
        %689 = vmatprep.subr.mxu0 0.0
        %690 = vmatpush2.msra.mxu0 0.0
        %691 = vmatprep.subr.mxu0 0.0
        %692 = vmatpush2.msra.mxu0 0.0
        %693 = vmatprep.subr.mxu0 0.0
        %694 = vmatpush2.msra.mxu0 0.0
        %695 = vmatprep.subr.mxu0 0.0
        %696 = vmatpush2.msra.mxu0 0.0
        %697 = vmatprep.mubr.f32.mxu0 0.0
        %698 = vmatmul.mubr.f32.gmra.mxu0 %v241
        %v699 = vpop.f32.mrf.mxu0
        %v700 = vadd.f32 0.0, %v699
        %v701 = vpop.f32.mrf.mxu0
        %702 = vdwg.mxu0
        %703 = vmatprep.subr.mxu0 0.0
        %704 = vmatpush1.msra.mxu0 0.0
        %705 = vmatprep.subr.mxu0 0.0
        %706 = vmatpush1.msra.mxu0 0.0
        %707 = vmatprep.subr.mxu0 0.0
        %708 = vmatpush1.msra.mxu0 0.0
        %709 = vmatprep.subr.mxu0 0.0
        %710 = vmatpush1.msra.mxu0 0.0
        %711 = vmatprep.subr.mxu0 0.0
        %712 = vmatpush1.msra.mxu0 0.0
        %713 = vmatprep.subr.mxu0 0.0
        %714 = vmatpush1.msra.mxu0 0.0
        %715 = vmatprep.subr.mxu0 0.0
        %716 = vmatpush1.msra.mxu0 0.0
        %717 = vmatprep.subr.mxu0 0.0
        %718 = vmatpush1.msra.mxu0 0.0
        %719 = vmatprep.subr.mxu0 0.0
        %720 = vmatpush1.msra.mxu0 0.0
        %721 = vmatprep.subr.mxu0 0.0
        %722 = vmatpush1.msra.mxu0 0.0
        %723 = vmatprep.subr.mxu0 0.0
        %724 = vmatpush1.msra.mxu0 0.0
        %725 = vmatprep.subr.mxu0 0.0
        %726 = vmatpush1.msra.mxu0 0.0
        %727 = vmatprep.subr.mxu0 0.0
        %728 = vmatpush1.msra.mxu0 %v625
        %729 = vmatprep.subr.mxu0 0.0
        %730 = vmatpush1.msra.mxu0 %v624
        %731 = vmatprep.subr.mxu0 0.0
        %732 = vmatpush1.msra.mxu0 %v623
        %733 = vmatprep.subr.mxu0 0.0
        %734 = vmatpush1.msra.mxu0 %v622
        %735 = vmatprep.subr.mxu0 0.0
        %736 = vmatpush2.msra.mxu0 0.0
        %737 = vmatprep.subr.mxu0 0.0
        %738 = vmatpush2.msra.mxu0 0.0
        %739 = vmatprep.subr.mxu0 0.0
        %740 = vmatpush2.msra.mxu0 0.0
        %741 = vmatprep.subr.mxu0 0.0
        %742 = vmatpush2.msra.mxu0 0.0
        %743 = vmatprep.subr.mxu0 0.0
        %744 = vmatpush2.msra.mxu0 0.0
        %745 = vmatprep.subr.mxu0 0.0
        %746 = vmatpush2.msra.mxu0 0.0
        %747 = vmatprep.subr.mxu0 0.0
        %748 = vmatpush2.msra.mxu0 0.0
        %749 = vmatprep.subr.mxu0 0.0
        %750 = vmatpush2.msra.mxu0 0.0
        %751 = vmatprep.subr.mxu0 0.0
        %752 = vmatpush2.msra.mxu0 0.0
        %753 = vmatprep.subr.mxu0 0.0
        %754 = vmatpush2.msra.mxu0 0.0
        %755 = vmatprep.subr.mxu0 0.0
        %756 = vmatpush2.msra.mxu0 0.0
        %757 = vmatprep.subr.mxu0 0.0
        %758 = vmatpush2.msra.mxu0 0.0
        %759 = vmatprep.subr.mxu0 0.0
        %760 = vmatpush2.msra.mxu0 0.0
        %761 = vmatprep.subr.mxu0 0.0
        %762 = vmatpush2.msra.mxu0 0.0
        %763 = vmatprep.subr.mxu0 0.0
        %764 = vmatpush2.msra.mxu0 0.0
        %765 = vmatprep.subr.mxu0 0.0
        %766 = vmatpush2.msra.mxu0 0.0
        %767 = vmatprep.mubr.f32.mxu0 0.0
        %768 = vmatmul.mubr.f32.gmra.mxu0 %v241
        %v769 = vpop.f32.mrf.mxu0
        %v770 = vadd.f32 0.0, %v769
        %v771 = vpop.f32.mrf.mxu0
        %772 = vdwg.mxu0
        %773 = vmatprep.subr.mxu0 0.0
        %774 = vmatpush1.msra.mxu0 0.0
        %775 = vmatprep.subr.mxu0 0.0
        %776 = vmatpush1.msra.mxu0 0.0
        %777 = vmatprep.subr.mxu0 0.0
        %778 = vmatpush1.msra.mxu0 0.0
        %779 = vmatprep.subr.mxu0 0.0
        %780 = vmatpush1.msra.mxu0 0.0
        %781 = vmatprep.subr.mxu0 0.0
        %782 = vmatpush1.msra.mxu0 0.0
        %783 = vmatprep.subr.mxu0 0.0
        %784 = vmatpush1.msra.mxu0 0.0
        %785 = vmatprep.subr.mxu0 0.0
        %786 = vmatpush1.msra.mxu0 0.0
        %787 = vmatprep.subr.mxu0 0.0
        %788 = vmatpush1.msra.mxu0 0.0
        %789 = vmatprep.subr.mxu0 0.0
        %790 = vmatpush1.msra.mxu0 0.0
        %791 = vmatprep.subr.mxu0 0.0
        %792 = vmatpush1.msra.mxu0 0.0
        %793 = vmatprep.subr.mxu0 0.0
        %794 = vmatpush1.msra.mxu0 0.0
        %795 = vmatprep.subr.mxu0 0.0
        %796 = vmatpush1.msra.mxu0 0.0
        %797 = vmatprep.subr.mxu0 0.0
        %798 = vmatpush1.msra.mxu0 %v630
        %799 = vmatprep.subr.mxu0 0.0
        %800 = vmatpush1.msra.mxu0 %v629
        %801 = vmatprep.subr.mxu0 0.0
        %802 = vmatpush1.msra.mxu0 %v628
        %803 = vmatprep.subr.mxu0 0.0
        %804 = vmatpush1.msra.mxu0 %v627
        %805 = vmatprep.subr.mxu0 0.0
        %806 = vmatpush2.msra.mxu0 0.0
        %807 = vmatprep.subr.mxu0 0.0
        %808 = vmatpush2.msra.mxu0 0.0
        %809 = vmatprep.subr.mxu0 0.0
        %810 = vmatpush2.msra.mxu0 0.0
        %811 = vmatprep.subr.mxu0 0.0
        %812 = vmatpush2.msra.mxu0 0.0
        %813 = vmatprep.subr.mxu0 0.0
        %814 = vmatpush2.msra.mxu0 0.0
        %815 = vmatprep.subr.mxu0 0.0
        %816 = vmatpush2.msra.mxu0 0.0
        %817 = vmatprep.subr.mxu0 0.0
        %818 = vmatpush2.msra.mxu0 0.0
        %819 = vmatprep.subr.mxu0 0.0
        %820 = vmatpush2.msra.mxu0 0.0
        %821 = vmatprep.subr.mxu0 0.0
        %822 = vmatpush2.msra.mxu0 0.0
        %823 = vmatprep.subr.mxu0 0.0
        %824 = vmatpush2.msra.mxu0 0.0
        %825 = vmatprep.subr.mxu0 0.0
        %826 = vmatpush2.msra.mxu0 0.0
        %827 = vmatprep.subr.mxu0 0.0
        %828 = vmatpush2.msra.mxu0 0.0
        %829 = vmatprep.subr.mxu0 0.0
        %830 = vmatpush2.msra.mxu0 0.0
        %831 = vmatprep.subr.mxu0 0.0
        %832 = vmatpush2.msra.mxu0 0.0
        %833 = vmatprep.subr.mxu0 0.0
        %834 = vmatpush2.msra.mxu0 0.0
        %835 = vmatprep.subr.mxu0 0.0
        %836 = vmatpush2.msra.mxu0 0.0
        %837 = vmatprep.mubr.f32.mxu0 0.0
        %838 = vmatmul.mubr.f32.gmra.mxu0 %v241
        %v839 = vpop.f32.mrf.mxu0
        %v840 = vadd.f32 0.0, %v839
        %v841 = vpop.f32.mrf.mxu0
        %842 = vdwg.mxu0
        %v844 = vsel %vm453, %v700, 0
        %v847 = vsel %vm453, %v770, 0
        %849 = vmatprep.subr.mxu0 0.0
        %850 = vmatpush1.xpose.msra.mxu0 0.0
        %851 = vmatprep.subr.mxu0 0.0
        %852 = vmatpush1.xpose.msra.mxu0 0.0
        %853 = vmatprep.subr.mxu0 0.0
        %854 = vmatpush1.xpose.msra.mxu0 0.0
        %855 = vmatprep.subr.mxu0 0.0
        %856 = vmatpush1.xpose.msra.mxu0 0.0
        %857 = vmatprep.subr.mxu0 0.0
        %858 = vmatpush1.xpose.msra.mxu0 0.0
        %859 = vmatprep.subr.mxu0 0.0
        %860 = vmatpush1.xpose.msra.mxu0 0.0
        %861 = vmatprep.subr.mxu0 0.0
        %862 = vmatpush1.xpose.msra.mxu0 0.0
        %863 = vmatprep.subr.mxu0 0.0
        %864 = vmatpush1.xpose.msra.mxu0 0.0
        %865 = vmatprep.subr.mxu0 0.0
        %866 = vmatpush1.xpose.msra.mxu0 0.0
        %867 = vmatprep.subr.mxu0 0.0
        %868 = vmatpush1.xpose.msra.mxu0 0.0
        %869 = vmatprep.subr.mxu0 0.0
        %870 = vmatpush1.xpose.msra.mxu0 0.0
        %871 = vmatprep.subr.mxu0 0.0
        %872 = vmatpush1.xpose.msra.mxu0 0.0
        %873 = vmatprep.subr.mxu0 0.0
        %874 = vmatpush1.xpose.msra.mxu0 0.0
        %875 = vmatprep.subr.mxu0 0.0
        %876 = vmatpush1.xpose.msra.mxu0 0.0
        %877 = vmatprep.subr.mxu0 0.0
        %878 = vmatpush1.xpose.msra.mxu0 0.0
        %879 = vmatprep.subr.mxu0 0.0
        %880 = vmatpush1.xpose.msra.mxu0 %v847
        %881 = vmatprep.subr.mxu0 0.0
        %882 = vmatpush2.xpose.msra.mxu0 0.0
        %883 = vmatprep.subr.mxu0 0.0
        %884 = vmatpush2.xpose.msra.mxu0 0.0
        %885 = vmatprep.subr.mxu0 0.0
        %886 = vmatpush2.xpose.msra.mxu0 0.0
        %887 = vmatprep.subr.mxu0 0.0
        %888 = vmatpush2.xpose.msra.mxu0 0.0
        %889 = vmatprep.subr.mxu0 0.0
        %890 = vmatpush2.xpose.msra.mxu0 0.0
        %891 = vmatprep.subr.mxu0 0.0
        %892 = vmatpush2.xpose.msra.mxu0 0.0
        %893 = vmatprep.subr.mxu0 0.0
        %894 = vmatpush2.xpose.msra.mxu0 0.0
        %895 = vmatprep.subr.mxu0 0.0
        %896 = vmatpush2.xpose.msra.mxu0 0.0
        %897 = vmatprep.subr.mxu0 0.0
        %898 = vmatpush2.xpose.msra.mxu0 0.0
        %899 = vmatprep.subr.mxu0 0.0
        %900 = vmatpush2.xpose.msra.mxu0 0.0
        %901 = vmatprep.subr.mxu0 0.0
        %902 = vmatpush2.xpose.msra.mxu0 0.0
        %903 = vmatprep.subr.mxu0 0.0
        %904 = vmatpush2.xpose.msra.mxu0 0.0
        %905 = vmatprep.subr.mxu0 0.0
        %906 = vmatpush2.xpose.msra.mxu0 0.0
        %907 = vmatprep.subr.mxu0 0.0
        %908 = vmatpush2.xpose.msra.mxu0 0.0
        %909 = vmatprep.subr.mxu0 0.0
        %910 = vmatpush2.xpose.msra.mxu0 0.0
        %911 = vmatprep.subr.mxu0 0.0
        %912 = vmatpush2.xpose.msra.mxu0 0.0
        %913 = vmatprep.mubr.f32.mxu0 0.0
        %914 = vmatmul.mubr.f32.gmra.mxu0 %v844
        %v915 = vpop.f32.mrf.mxu0
        %v916 = vadd.f32 0.0, %v915
        %v917 = vpop.f32.mrf.mxu0
        %918 = vdwg.mxu0
        %v919 = vmul.f32 %v916, 0.35355338
        %v920 = vsel %vm225, %v919, -1e+30
        %v921 = vsel %vm453, %v920, -inf
        %922 = vmax.xlane.f32.xlu0 %v921
        %v923 = vpop.xlane.xlu0 %922
        %v924 = vsub.f32 %v920, %v923
        %v925 = vmul.f32 %v924, 1.442695
        %v926 = vpow.pop %v925
        %v927 = vsel %vm453, %v926, 0.0
        %928 = vadd.xlane.f32.xlu0 %v927
        %v929 = vpop.xlane.xlu0 %928
        %v930 = vrcp.pop %v929
        %v931 = vmul.f32 %v926, %v930
        %v933 = vsel %vm453, %v931, 0
        %935 = vmatprep.subr.mxu0 0.0
        %936 = vmatpush1.msra.mxu0 0.0
        %937 = vmatprep.subr.mxu0 0.0
        %938 = vmatpush1.msra.mxu0 0.0
        %939 = vmatprep.subr.mxu0 0.0
        %940 = vmatpush1.msra.mxu0 0.0
        %941 = vmatprep.subr.mxu0 0.0
        %942 = vmatpush1.msra.mxu0 0.0
        %943 = vmatprep.subr.mxu0 0.0
        %944 = vmatpush1.msra.mxu0 0.0
        %945 = vmatprep.subr.mxu0 0.0
        %946 = vmatpush1.msra.mxu0 0.0
        %947 = vmatprep.subr.mxu0 0.0
        %948 = vmatpush1.msra.mxu0 0.0
        %949 = vmatprep.subr.mxu0 0.0
        %950 = vmatpush1.msra.mxu0 0.0
        %951 = vmatprep.subr.mxu0 0.0
        %952 = vmatpush1.msra.mxu0 0.0
        %953 = vmatprep.subr.mxu0 0.0
        %954 = vmatpush1.msra.mxu0 0.0
        %955 = vmatprep.subr.mxu0 0.0
        %956 = vmatpush1.msra.mxu0 0.0
        %957 = vmatprep.subr.mxu0 0.0
        %958 = vmatpush1.msra.mxu0 0.0
        %959 = vmatprep.subr.mxu0 0.0
        %960 = vmatpush1.msra.mxu0 0.0
        %961 = vmatprep.subr.mxu0 0.0
        %962 = vmatpush1.msra.mxu0 0.0
        %963 = vmatprep.subr.mxu0 0.0
        %964 = vmatpush1.msra.mxu0 0.0
        %965 = vmatprep.subr.mxu0 0.0
        %966 = vmatpush1.msra.mxu0 %v840
        %967 = vmatprep.subr.mxu0 0.0
        %968 = vmatpush2.msra.mxu0 0.0
        %969 = vmatprep.subr.mxu0 0.0
        %970 = vmatpush2.msra.mxu0 0.0
        %971 = vmatprep.subr.mxu0 0.0
        %972 = vmatpush2.msra.mxu0 0.0
        %973 = vmatprep.subr.mxu0 0.0
        %974 = vmatpush2.msra.mxu0 0.0
        %975 = vmatprep.subr.mxu0 0.0
        %976 = vmatpush2.msra.mxu0 0.0
        %977 = vmatprep.subr.mxu0 0.0
        %978 = vmatpush2.msra.mxu0 0.0
        %979 = vmatprep.subr.mxu0 0.0
        %980 = vmatpush2.msra.mxu0 0.0
        %981 = vmatprep.subr.mxu0 0.0
        %982 = vmatpush2.msra.mxu0 0.0
        %983 = vmatprep.subr.mxu0 0.0
        %984 = vmatpush2.msra.mxu0 0.0
        %985 = vmatprep.subr.mxu0 0.0
        %986 = vmatpush2.msra.mxu0 0.0
        %987 = vmatprep.subr.mxu0 0.0
        %988 = vmatpush2.msra.mxu0 0.0
        %989 = vmatprep.subr.mxu0 0.0
        %990 = vmatpush2.msra.mxu0 0.0
        %991 = vmatprep.subr.mxu0 0.0
        %992 = vmatpush2.msra.mxu0 0.0
        %993 = vmatprep.subr.mxu0 0.0
        %994 = vmatpush2.msra.mxu0 0.0
        %995 = vmatprep.subr.mxu0 0.0
        %996 = vmatpush2.msra.mxu0 0.0
        %997 = vmatprep.subr.mxu0 0.0
        %998 = vmatpush2.msra.mxu0 0.0
        %999 = vmatprep.mubr.f32.mxu0 0.0
        %1000 = vmatmul.mubr.f32.gmra.mxu0 %v933
        %v1001 = vpop.f32.mrf.mxu0
        %v1002 = vadd.f32 0.0, %v1001
        %v1003 = vpop.f32.mrf.mxu0
        %1004 = vdwg.mxu0
        %v1006 = vsel %vm453, %v1002, 0
        %1008 = vmatprep.subr.mxu0 0.0
        %1009 = vmatpush1.msra.mxu0 0.0
        %1010 = vmatprep.subr.mxu0 0.0
        %1011 = vmatpush1.msra.mxu0 0.0
        %1012 = vmatprep.subr.mxu0 0.0
        %1013 = vmatpush1.msra.mxu0 0.0
        %1014 = vmatprep.subr.mxu0 0.0
        %1015 = vmatpush1.msra.mxu0 0.0
        %1016 = vmatprep.subr.mxu0 0.0
        %1017 = vmatpush1.msra.mxu0 0.0
        %1018 = vmatprep.subr.mxu0 0.0
        %1019 = vmatpush1.msra.mxu0 0.0
        %1020 = vmatprep.subr.mxu0 0.0
        %1021 = vmatpush1.msra.mxu0 0.0
        %1022 = vmatprep.subr.mxu0 0.0
        %1023 = vmatpush1.msra.mxu0 0.0
        %1024 = vmatprep.subr.mxu0 0.0
        %1025 = vmatpush1.msra.mxu0 0.0
        %1026 = vmatprep.subr.mxu0 0.0
        %1027 = vmatpush1.msra.mxu0 0.0
        %1028 = vmatprep.subr.mxu0 0.0
        %1029 = vmatpush1.msra.mxu0 0.0
        %1030 = vmatprep.subr.mxu0 0.0
        %1031 = vmatpush1.msra.mxu0 0.0
        %1032 = vmatprep.subr.mxu0 0.0
        %1033 = vmatpush1.msra.mxu0 0.0
        %1034 = vmatprep.subr.mxu0 0.0
        %1035 = vmatpush1.msra.mxu0 0.0
        %1036 = vmatprep.subr.mxu0 0.0
        %1037 = vmatpush1.msra.mxu0 0.0
        %1038 = vmatprep.subr.mxu0 0.0
        %1039 = vmatpush1.msra.mxu0 %v632
        %1040 = vmatprep.subr.mxu0 0.0
        %1041 = vmatpush2.msra.mxu0 0.0
        %1042 = vmatprep.subr.mxu0 0.0
        %1043 = vmatpush2.msra.mxu0 0.0
        %1044 = vmatprep.subr.mxu0 0.0
        %1045 = vmatpush2.msra.mxu0 0.0
        %1046 = vmatprep.subr.mxu0 0.0
        %1047 = vmatpush2.msra.mxu0 0.0
        %1048 = vmatprep.subr.mxu0 0.0
        %1049 = vmatpush2.msra.mxu0 0.0
        %1050 = vmatprep.subr.mxu0 0.0
        %1051 = vmatpush2.msra.mxu0 0.0
        %1052 = vmatprep.subr.mxu0 0.0
        %1053 = vmatpush2.msra.mxu0 0.0
        %1054 = vmatprep.subr.mxu0 0.0
        %1055 = vmatpush2.msra.mxu0 0.0
        %1056 = vmatprep.subr.mxu0 0.0
        %1057 = vmatpush2.msra.mxu0 0.0
        %1058 = vmatprep.subr.mxu0 0.0
        %1059 = vmatpush2.msra.mxu0 0.0
        %1060 = vmatprep.subr.mxu0 0.0
        %1061 = vmatpush2.msra.mxu0 0.0
        %1062 = vmatprep.subr.mxu0 0.0
        %1063 = vmatpush2.msra.mxu0 0.0
        %1064 = vmatprep.subr.mxu0 0.0
        %1065 = vmatpush2.msra.mxu0 0.0
        %1066 = vmatprep.subr.mxu0 0.0
        %1067 = vmatpush2.msra.mxu0 0.0
        %1068 = vmatprep.subr.mxu0 0.0
        %1069 = vmatpush2.msra.mxu0 0.0
        %1070 = vmatprep.subr.mxu0 0.0
        %1071 = vmatpush2.msra.mxu0 0.0
        %1072 = vmatprep.mubr.f32.mxu0 0.0
        %1073 = vmatmul.mubr.f32.gmra.mxu0 %v1006
        %v1074 = vpop.f32.mrf.mxu0
        %v1075 = vadd.f32 0.0, %v1074
        %v1076 = vpop.f32.mrf.mxu0
        %1077 = vdwg.mxu0
        %v1079 = vsel %vm453, %v613, 0
        %1081 = vmatprep.subr.mxu0 0.0
        %1082 = vmatpush1.msra.mxu0 0.0
        %1083 = vmatprep.subr.mxu0 0.0
        %1084 = vmatpush1.msra.mxu0 0.0
        %1085 = vmatprep.subr.mxu0 0.0
        %1086 = vmatpush1.msra.mxu0 0.0
        %1087 = vmatprep.subr.mxu0 0.0
        %1088 = vmatpush1.msra.mxu0 0.0
        %1089 = vmatprep.subr.mxu0 0.0
        %1090 = vmatpush1.msra.mxu0 0.0
        %1091 = vmatprep.subr.mxu0 0.0
        %1092 = vmatpush1.msra.mxu0 0.0
        %1093 = vmatprep.subr.mxu0 0.0
        %1094 = vmatpush1.msra.mxu0 0.0
        %1095 = vmatprep.subr.mxu0 0.0
        %1096 = vmatpush1.msra.mxu0 0.0
        %1097 = vmatprep.subr.mxu0 0.0
        %1098 = vmatpush1.msra.mxu0 0.0
        %1099 = vmatprep.subr.mxu0 0.0
        %1100 = vmatpush1.msra.mxu0 0.0
        %1101 = vmatprep.subr.mxu0 0.0
        %1102 = vmatpush1.msra.mxu0 0.0
        %1103 = vmatprep.subr.mxu0 0.0
        %1104 = vmatpush1.msra.mxu0 0.0
        %1105 = vmatprep.subr.mxu0 0.0
        %1106 = vmatpush1.msra.mxu0 0.0
        %1107 = vmatprep.subr.mxu0 0.0
        %1108 = vmatpush1.msra.mxu0 0.0
        %1109 = vmatprep.subr.mxu0 0.0
        %1110 = vmatpush1.msra.mxu0 0.0
        %1111 = vmatprep.subr.mxu0 0.0
        %1112 = vmatpush1.msra.mxu0 %v238
        %1113 = vmatprep.subr.mxu0 0.0
        %1114 = vmatpush2.msra.mxu0 0.0
        %1115 = vmatprep.subr.mxu0 0.0
        %1116 = vmatpush2.msra.mxu0 0.0
        %1117 = vmatprep.subr.mxu0 0.0
        %1118 = vmatpush2.msra.mxu0 0.0
        %1119 = vmatprep.subr.mxu0 0.0
        %1120 = vmatpush2.msra.mxu0 0.0
        %1121 = vmatprep.subr.mxu0 0.0
        %1122 = vmatpush2.msra.mxu0 0.0
        %1123 = vmatprep.subr.mxu0 0.0
        %1124 = vmatpush2.msra.mxu0 0.0
        %1125 = vmatprep.subr.mxu0 0.0
        %1126 = vmatpush2.msra.mxu0 0.0
        %1127 = vmatprep.subr.mxu0 0.0
        %1128 = vmatpush2.msra.mxu0 0.0
        %1129 = vmatprep.subr.mxu0 0.0
        %1130 = vmatpush2.msra.mxu0 0.0
        %1131 = vmatprep.subr.mxu0 0.0
        %1132 = vmatpush2.msra.mxu0 0.0
        %1133 = vmatprep.subr.mxu0 0.0
        %1134 = vmatpush2.msra.mxu0 0.0
        %1135 = vmatprep.subr.mxu0 0.0
        %1136 = vmatpush2.msra.mxu0 0.0
        %1137 = vmatprep.subr.mxu0 0.0
        %1138 = vmatpush2.msra.mxu0 0.0
        %1139 = vmatprep.subr.mxu0 0.0
        %1140 = vmatpush2.msra.mxu0 0.0
        %1141 = vmatprep.subr.mxu0 0.0
        %1142 = vmatpush2.msra.mxu0 0.0
        %1143 = vmatprep.subr.mxu0 0.0
        %1144 = vmatpush2.msra.mxu0 0.0
        %1145 = vmatprep.mubr.f32.mxu0 0.0
        %1146 = vmatmul.mubr.f32.gmra.mxu0 %v1079
        %v1147 = vpop.f32.mrf.mxu0
        %v1148 = vadd.f32 %v1075, %v1147
        %v1149 = vpop.f32.mrf.mxu0
        %1150 = vdwg.mxu0
        %s1151 = scalar_lea.vmem %s1, 64
        %v1152 = vld [vmem:[%s1151] sm:$0xff]
        %v1153 = vld [vmem:[%s1151 + $0x8] sm:$0xff]
        %v1154 = vld [vmem:[%s1151 + $0x10] sm:$0xff]
        %v1155 = vld [vmem:[%s1151 + $0x18] sm:$0xff]
        %s1156 = scalar_lea.vmem %s2, 64
        %v1157 = vld [vmem:[%s1156] sm:$0xff]
        %v1158 = vld [vmem:[%s1156 + $0x8] sm:$0xff]
        %v1159 = vld [vmem:[%s1156 + $0x10] sm:$0xff]
        %v1160 = vld [vmem:[%s1156 + $0x18] sm:$0xff]
        %s1161 = scalar_lea.vmem %s3, 64
        %v1162 = vld [vmem:[%s1161] sm:$0xff]
        %v1163 = vld [vmem:[%s1161 + $0x8] sm:$0xff]
        %v1164 = vld [vmem:[%s1161 + $0x10] sm:$0xff]
        %v1165 = vld [vmem:[%s1161 + $0x18] sm:$0xff]
        %s1166 = scalar_lea.vmem %s4, 16
        %v1167 = vld [vmem:[%s1166] sm:$0xff]
        %1168 = vmatprep.subr.mxu0 0.0
        %1169 = vmatpush1.msra.mxu0 0.0
        %1170 = vmatprep.subr.mxu0 0.0
        %1171 = vmatpush1.msra.mxu0 0.0
        %1172 = vmatprep.subr.mxu0 0.0
        %1173 = vmatpush1.msra.mxu0 0.0
        %1174 = vmatprep.subr.mxu0 0.0
        %1175 = vmatpush1.msra.mxu0 0.0
        %1176 = vmatprep.subr.mxu0 0.0
        %1177 = vmatpush1.msra.mxu0 0.0
        %1178 = vmatprep.subr.mxu0 0.0
        %1179 = vmatpush1.msra.mxu0 0.0
        %1180 = vmatprep.subr.mxu0 0.0
        %1181 = vmatpush1.msra.mxu0 0.0
        %1182 = vmatprep.subr.mxu0 0.0
        %1183 = vmatpush1.msra.mxu0 0.0
        %1184 = vmatprep.subr.mxu0 0.0
        %1185 = vmatpush1.msra.mxu0 0.0
        %1186 = vmatprep.subr.mxu0 0.0
        %1187 = vmatpush1.msra.mxu0 0.0
        %1188 = vmatprep.subr.mxu0 0.0
        %1189 = vmatpush1.msra.mxu0 0.0
        %1190 = vmatprep.subr.mxu0 0.0
        %1191 = vmatpush1.msra.mxu0 0.0
        %1192 = vmatprep.subr.mxu0 0.0
        %1193 = vmatpush1.msra.mxu0 %v1155
        %1194 = vmatprep.subr.mxu0 0.0
        %1195 = vmatpush1.msra.mxu0 %v1154
        %1196 = vmatprep.subr.mxu0 0.0
        %1197 = vmatpush1.msra.mxu0 %v1153
        %1198 = vmatprep.subr.mxu0 0.0
        %1199 = vmatpush1.msra.mxu0 %v1152
        %1200 = vmatprep.subr.mxu0 0.0
        %1201 = vmatpush2.msra.mxu0 0.0
        %1202 = vmatprep.subr.mxu0 0.0
        %1203 = vmatpush2.msra.mxu0 0.0
        %1204 = vmatprep.subr.mxu0 0.0
        %1205 = vmatpush2.msra.mxu0 0.0
        %1206 = vmatprep.subr.mxu0 0.0
        %1207 = vmatpush2.msra.mxu0 0.0
        %1208 = vmatprep.subr.mxu0 0.0
        %1209 = vmatpush2.msra.mxu0 0.0
        %1210 = vmatprep.subr.mxu0 0.0
        %1211 = vmatpush2.msra.mxu0 0.0
        %1212 = vmatprep.subr.mxu0 0.0
        %1213 = vmatpush2.msra.mxu0 0.0
        %1214 = vmatprep.subr.mxu0 0.0
        %1215 = vmatpush2.msra.mxu0 0.0
        %1216 = vmatprep.subr.mxu0 0.0
        %1217 = vmatpush2.msra.mxu0 0.0
        %1218 = vmatprep.subr.mxu0 0.0
        %1219 = vmatpush2.msra.mxu0 0.0
        %1220 = vmatprep.subr.mxu0 0.0
        %1221 = vmatpush2.msra.mxu0 0.0
        %1222 = vmatprep.subr.mxu0 0.0
        %1223 = vmatpush2.msra.mxu0 0.0
        %1224 = vmatprep.subr.mxu0 0.0
        %1225 = vmatpush2.msra.mxu0 0.0
        %1226 = vmatprep.subr.mxu0 0.0
        %1227 = vmatpush2.msra.mxu0 0.0
        %1228 = vmatprep.subr.mxu0 0.0
        %1229 = vmatpush2.msra.mxu0 0.0
        %1230 = vmatprep.subr.mxu0 0.0
        %1231 = vmatpush2.msra.mxu0 0.0
        %1232 = vmatprep.mubr.f32.mxu0 0.0
        %1233 = vmatmul.mubr.f32.gmra.mxu0 %v241
        %v1234 = vpop.f32.mrf.mxu0
        %v1235 = vadd.f32 0.0, %v1234
        %v1236 = vpop.f32.mrf.mxu0
        %1237 = vdwg.mxu0
        %1238 = vmatprep.subr.mxu0 0.0
        %1239 = vmatpush1.msra.mxu0 0.0
        %1240 = vmatprep.subr.mxu0 0.0
        %1241 = vmatpush1.msra.mxu0 0.0
        %1242 = vmatprep.subr.mxu0 0.0
        %1243 = vmatpush1.msra.mxu0 0.0
        %1244 = vmatprep.subr.mxu0 0.0
        %1245 = vmatpush1.msra.mxu0 0.0
        %1246 = vmatprep.subr.mxu0 0.0
        %1247 = vmatpush1.msra.mxu0 0.0
        %1248 = vmatprep.subr.mxu0 0.0
        %1249 = vmatpush1.msra.mxu0 0.0
        %1250 = vmatprep.subr.mxu0 0.0
        %1251 = vmatpush1.msra.mxu0 0.0
        %1252 = vmatprep.subr.mxu0 0.0
        %1253 = vmatpush1.msra.mxu0 0.0
        %1254 = vmatprep.subr.mxu0 0.0
        %1255 = vmatpush1.msra.mxu0 0.0
        %1256 = vmatprep.subr.mxu0 0.0
        %1257 = vmatpush1.msra.mxu0 0.0
        %1258 = vmatprep.subr.mxu0 0.0
        %1259 = vmatpush1.msra.mxu0 0.0
        %1260 = vmatprep.subr.mxu0 0.0
        %1261 = vmatpush1.msra.mxu0 0.0
        %1262 = vmatprep.subr.mxu0 0.0
        %1263 = vmatpush1.msra.mxu0 %v1160
        %1264 = vmatprep.subr.mxu0 0.0
        %1265 = vmatpush1.msra.mxu0 %v1159
        %1266 = vmatprep.subr.mxu0 0.0
        %1267 = vmatpush1.msra.mxu0 %v1158
        %1268 = vmatprep.subr.mxu0 0.0
        %1269 = vmatpush1.msra.mxu0 %v1157
        %1270 = vmatprep.subr.mxu0 0.0
        %1271 = vmatpush2.msra.mxu0 0.0
        %1272 = vmatprep.subr.mxu0 0.0
        %1273 = vmatpush2.msra.mxu0 0.0
        %1274 = vmatprep.subr.mxu0 0.0
        %1275 = vmatpush2.msra.mxu0 0.0
        %1276 = vmatprep.subr.mxu0 0.0
        %1277 = vmatpush2.msra.mxu0 0.0
        %1278 = vmatprep.subr.mxu0 0.0
        %1279 = vmatpush2.msra.mxu0 0.0
        %1280 = vmatprep.subr.mxu0 0.0
        %1281 = vmatpush2.msra.mxu0 0.0
        %1282 = vmatprep.subr.mxu0 0.0
        %1283 = vmatpush2.msra.mxu0 0.0
        %1284 = vmatprep.subr.mxu0 0.0
        %1285 = vmatpush2.msra.mxu0 0.0
        %1286 = vmatprep.subr.mxu0 0.0
        %1287 = vmatpush2.msra.mxu0 0.0
        %1288 = vmatprep.subr.mxu0 0.0
        %1289 = vmatpush2.msra.mxu0 0.0
        %1290 = vmatprep.subr.mxu0 0.0
        %1291 = vmatpush2.msra.mxu0 0.0
        %1292 = vmatprep.subr.mxu0 0.0
        %1293 = vmatpush2.msra.mxu0 0.0
        %1294 = vmatprep.subr.mxu0 0.0
        %1295 = vmatpush2.msra.mxu0 0.0
        %1296 = vmatprep.subr.mxu0 0.0
        %1297 = vmatpush2.msra.mxu0 0.0
        %1298 = vmatprep.subr.mxu0 0.0
        %1299 = vmatpush2.msra.mxu0 0.0
        %1300 = vmatprep.subr.mxu0 0.0
        %1301 = vmatpush2.msra.mxu0 0.0
        %1302 = vmatprep.mubr.f32.mxu0 0.0
        %1303 = vmatmul.mubr.f32.gmra.mxu0 %v241
        %v1304 = vpop.f32.mrf.mxu0
        %v1305 = vadd.f32 0.0, %v1304
        %v1306 = vpop.f32.mrf.mxu0
        %1307 = vdwg.mxu0
        %1308 = vmatprep.subr.mxu0 0.0
        %1309 = vmatpush1.msra.mxu0 0.0
        %1310 = vmatprep.subr.mxu0 0.0
        %1311 = vmatpush1.msra.mxu0 0.0
        %1312 = vmatprep.subr.mxu0 0.0
        %1313 = vmatpush1.msra.mxu0 0.0
        %1314 = vmatprep.subr.mxu0 0.0
        %1315 = vmatpush1.msra.mxu0 0.0
        %1316 = vmatprep.subr.mxu0 0.0
        %1317 = vmatpush1.msra.mxu0 0.0
        %1318 = vmatprep.subr.mxu0 0.0
        %1319 = vmatpush1.msra.mxu0 0.0
        %1320 = vmatprep.subr.mxu0 0.0
        %1321 = vmatpush1.msra.mxu0 0.0
        %1322 = vmatprep.subr.mxu0 0.0
        %1323 = vmatpush1.msra.mxu0 0.0
        %1324 = vmatprep.subr.mxu0 0.0
        %1325 = vmatpush1.msra.mxu0 0.0
        %1326 = vmatprep.subr.mxu0 0.0
        %1327 = vmatpush1.msra.mxu0 0.0
        %1328 = vmatprep.subr.mxu0 0.0
        %1329 = vmatpush1.msra.mxu0 0.0
        %1330 = vmatprep.subr.mxu0 0.0
        %1331 = vmatpush1.msra.mxu0 0.0
        %1332 = vmatprep.subr.mxu0 0.0
        %1333 = vmatpush1.msra.mxu0 %v1165
        %1334 = vmatprep.subr.mxu0 0.0
        %1335 = vmatpush1.msra.mxu0 %v1164
        %1336 = vmatprep.subr.mxu0 0.0
        %1337 = vmatpush1.msra.mxu0 %v1163
        %1338 = vmatprep.subr.mxu0 0.0
        %1339 = vmatpush1.msra.mxu0 %v1162
        %1340 = vmatprep.subr.mxu0 0.0
        %1341 = vmatpush2.msra.mxu0 0.0
        %1342 = vmatprep.subr.mxu0 0.0
        %1343 = vmatpush2.msra.mxu0 0.0
        %1344 = vmatprep.subr.mxu0 0.0
        %1345 = vmatpush2.msra.mxu0 0.0
        %1346 = vmatprep.subr.mxu0 0.0
        %1347 = vmatpush2.msra.mxu0 0.0
        %1348 = vmatprep.subr.mxu0 0.0
        %1349 = vmatpush2.msra.mxu0 0.0
        %1350 = vmatprep.subr.mxu0 0.0
        %1351 = vmatpush2.msra.mxu0 0.0
        %1352 = vmatprep.subr.mxu0 0.0
        %1353 = vmatpush2.msra.mxu0 0.0
        %1354 = vmatprep.subr.mxu0 0.0
        %1355 = vmatpush2.msra.mxu0 0.0
        %1356 = vmatprep.subr.mxu0 0.0
        %1357 = vmatpush2.msra.mxu0 0.0
        %1358 = vmatprep.subr.mxu0 0.0
        %1359 = vmatpush2.msra.mxu0 0.0
        %1360 = vmatprep.subr.mxu0 0.0
        %1361 = vmatpush2.msra.mxu0 0.0
        %1362 = vmatprep.subr.mxu0 0.0
        %1363 = vmatpush2.msra.mxu0 0.0
        %1364 = vmatprep.subr.mxu0 0.0
        %1365 = vmatpush2.msra.mxu0 0.0
        %1366 = vmatprep.subr.mxu0 0.0
        %1367 = vmatpush2.msra.mxu0 0.0
        %1368 = vmatprep.subr.mxu0 0.0
        %1369 = vmatpush2.msra.mxu0 0.0
        %1370 = vmatprep.subr.mxu0 0.0
        %1371 = vmatpush2.msra.mxu0 0.0
        %1372 = vmatprep.mubr.f32.mxu0 0.0
        %1373 = vmatmul.mubr.f32.gmra.mxu0 %v241
        %v1374 = vpop.f32.mrf.mxu0
        %v1375 = vadd.f32 0.0, %v1374
        %v1376 = vpop.f32.mrf.mxu0
        %1377 = vdwg.mxu0
        %v1379 = vsel %vm453, %v1235, 0
        %v1382 = vsel %vm453, %v1305, 0
        %1384 = vmatprep.subr.mxu0 0.0
        %1385 = vmatpush1.xpose.msra.mxu0 0.0
        %1386 = vmatprep.subr.mxu0 0.0
        %1387 = vmatpush1.xpose.msra.mxu0 0.0
        %1388 = vmatprep.subr.mxu0 0.0
        %1389 = vmatpush1.xpose.msra.mxu0 0.0
        %1390 = vmatprep.subr.mxu0 0.0
        %1391 = vmatpush1.xpose.msra.mxu0 0.0
        %1392 = vmatprep.subr.mxu0 0.0
        %1393 = vmatpush1.xpose.msra.mxu0 0.0
        %1394 = vmatprep.subr.mxu0 0.0
        %1395 = vmatpush1.xpose.msra.mxu0 0.0
        %1396 = vmatprep.subr.mxu0 0.0
        %1397 = vmatpush1.xpose.msra.mxu0 0.0
        %1398 = vmatprep.subr.mxu0 0.0
        %1399 = vmatpush1.xpose.msra.mxu0 0.0
        %1400 = vmatprep.subr.mxu0 0.0
        %1401 = vmatpush1.xpose.msra.mxu0 0.0
        %1402 = vmatprep.subr.mxu0 0.0
        %1403 = vmatpush1.xpose.msra.mxu0 0.0
        %1404 = vmatprep.subr.mxu0 0.0
        %1405 = vmatpush1.xpose.msra.mxu0 0.0
        %1406 = vmatprep.subr.mxu0 0.0
        %1407 = vmatpush1.xpose.msra.mxu0 0.0
        %1408 = vmatprep.subr.mxu0 0.0
        %1409 = vmatpush1.xpose.msra.mxu0 0.0
        %1410 = vmatprep.subr.mxu0 0.0
        %1411 = vmatpush1.xpose.msra.mxu0 0.0
        %1412 = vmatprep.subr.mxu0 0.0
        %1413 = vmatpush1.xpose.msra.mxu0 0.0
        %1414 = vmatprep.subr.mxu0 0.0
        %1415 = vmatpush1.xpose.msra.mxu0 %v1382
        %1416 = vmatprep.subr.mxu0 0.0
        %1417 = vmatpush2.xpose.msra.mxu0 0.0
        %1418 = vmatprep.subr.mxu0 0.0
        %1419 = vmatpush2.xpose.msra.mxu0 0.0
        %1420 = vmatprep.subr.mxu0 0.0
        %1421 = vmatpush2.xpose.msra.mxu0 0.0
        %1422 = vmatprep.subr.mxu0 0.0
        %1423 = vmatpush2.xpose.msra.mxu0 0.0
        %1424 = vmatprep.subr.mxu0 0.0
        %1425 = vmatpush2.xpose.msra.mxu0 0.0
        %1426 = vmatprep.subr.mxu0 0.0
        %1427 = vmatpush2.xpose.msra.mxu0 0.0
        %1428 = vmatprep.subr.mxu0 0.0
        %1429 = vmatpush2.xpose.msra.mxu0 0.0
        %1430 = vmatprep.subr.mxu0 0.0
        %1431 = vmatpush2.xpose.msra.mxu0 0.0
        %1432 = vmatprep.subr.mxu0 0.0
        %1433 = vmatpush2.xpose.msra.mxu0 0.0
        %1434 = vmatprep.subr.mxu0 0.0
        %1435 = vmatpush2.xpose.msra.mxu0 0.0
        %1436 = vmatprep.subr.mxu0 0.0
        %1437 = vmatpush2.xpose.msra.mxu0 0.0
        %1438 = vmatprep.subr.mxu0 0.0
        %1439 = vmatpush2.xpose.msra.mxu0 0.0
        %1440 = vmatprep.subr.mxu0 0.0
        %1441 = vmatpush2.xpose.msra.mxu0 0.0
        %1442 = vmatprep.subr.mxu0 0.0
        %1443 = vmatpush2.xpose.msra.mxu0 0.0
        %1444 = vmatprep.subr.mxu0 0.0
        %1445 = vmatpush2.xpose.msra.mxu0 0.0
        %1446 = vmatprep.subr.mxu0 0.0
        %1447 = vmatpush2.xpose.msra.mxu0 0.0
        %1448 = vmatprep.mubr.f32.mxu0 0.0
        %1449 = vmatmul.mubr.f32.gmra.mxu0 %v1379
        %v1450 = vpop.f32.mrf.mxu0
        %v1451 = vadd.f32 0.0, %v1450
        %v1452 = vpop.f32.mrf.mxu0
        %1453 = vdwg.mxu0
        %v1454 = vmul.f32 %v1451, 0.35355338
        %v1455 = vsel %vm225, %v1454, -1e+30
        %v1456 = vsel %vm453, %v1455, -inf
        %1457 = vmax.xlane.f32.xlu0 %v1456
        %v1458 = vpop.xlane.xlu0 %1457
        %v1459 = vsub.f32 %v1455, %v1458
        %v1460 = vmul.f32 %v1459, 1.442695
        %v1461 = vpow.pop %v1460
        %v1462 = vsel %vm453, %v1461, 0.0
        %1463 = vadd.xlane.f32.xlu0 %v1462
        %v1464 = vpop.xlane.xlu0 %1463
        %v1465 = vrcp.pop %v1464
        %v1466 = vmul.f32 %v1461, %v1465
        %v1468 = vsel %vm453, %v1466, 0
        %1470 = vmatprep.subr.mxu0 0.0
        %1471 = vmatpush1.msra.mxu0 0.0
        %1472 = vmatprep.subr.mxu0 0.0
        %1473 = vmatpush1.msra.mxu0 0.0
        %1474 = vmatprep.subr.mxu0 0.0
        %1475 = vmatpush1.msra.mxu0 0.0
        %1476 = vmatprep.subr.mxu0 0.0
        %1477 = vmatpush1.msra.mxu0 0.0
        %1478 = vmatprep.subr.mxu0 0.0
        %1479 = vmatpush1.msra.mxu0 0.0
        %1480 = vmatprep.subr.mxu0 0.0
        %1481 = vmatpush1.msra.mxu0 0.0
        %1482 = vmatprep.subr.mxu0 0.0
        %1483 = vmatpush1.msra.mxu0 0.0
        %1484 = vmatprep.subr.mxu0 0.0
        %1485 = vmatpush1.msra.mxu0 0.0
        %1486 = vmatprep.subr.mxu0 0.0
        %1487 = vmatpush1.msra.mxu0 0.0
        %1488 = vmatprep.subr.mxu0 0.0
        %1489 = vmatpush1.msra.mxu0 0.0
        %1490 = vmatprep.subr.mxu0 0.0
        %1491 = vmatpush1.msra.mxu0 0.0
        %1492 = vmatprep.subr.mxu0 0.0
        %1493 = vmatpush1.msra.mxu0 0.0
        %1494 = vmatprep.subr.mxu0 0.0
        %1495 = vmatpush1.msra.mxu0 0.0
        %1496 = vmatprep.subr.mxu0 0.0
        %1497 = vmatpush1.msra.mxu0 0.0
        %1498 = vmatprep.subr.mxu0 0.0
        %1499 = vmatpush1.msra.mxu0 0.0
        %1500 = vmatprep.subr.mxu0 0.0
        %1501 = vmatpush1.msra.mxu0 %v1375
        %1502 = vmatprep.subr.mxu0 0.0
        %1503 = vmatpush2.msra.mxu0 0.0
        %1504 = vmatprep.subr.mxu0 0.0
        %1505 = vmatpush2.msra.mxu0 0.0
        %1506 = vmatprep.subr.mxu0 0.0
        %1507 = vmatpush2.msra.mxu0 0.0
        %1508 = vmatprep.subr.mxu0 0.0
        %1509 = vmatpush2.msra.mxu0 0.0
        %1510 = vmatprep.subr.mxu0 0.0
        %1511 = vmatpush2.msra.mxu0 0.0
        %1512 = vmatprep.subr.mxu0 0.0
        %1513 = vmatpush2.msra.mxu0 0.0
        %1514 = vmatprep.subr.mxu0 0.0
        %1515 = vmatpush2.msra.mxu0 0.0
        %1516 = vmatprep.subr.mxu0 0.0
        %1517 = vmatpush2.msra.mxu0 0.0
        %1518 = vmatprep.subr.mxu0 0.0
        %1519 = vmatpush2.msra.mxu0 0.0
        %1520 = vmatprep.subr.mxu0 0.0
        %1521 = vmatpush2.msra.mxu0 0.0
        %1522 = vmatprep.subr.mxu0 0.0
        %1523 = vmatpush2.msra.mxu0 0.0
        %1524 = vmatprep.subr.mxu0 0.0
        %1525 = vmatpush2.msra.mxu0 0.0
        %1526 = vmatprep.subr.mxu0 0.0
        %1527 = vmatpush2.msra.mxu0 0.0
        %1528 = vmatprep.subr.mxu0 0.0
        %1529 = vmatpush2.msra.mxu0 0.0
        %1530 = vmatprep.subr.mxu0 0.0
        %1531 = vmatpush2.msra.mxu0 0.0
        %1532 = vmatprep.subr.mxu0 0.0
        %1533 = vmatpush2.msra.mxu0 0.0
        %1534 = vmatprep.mubr.f32.mxu0 0.0
        %1535 = vmatmul.mubr.f32.gmra.mxu0 %v1468
        %v1536 = vpop.f32.mrf.mxu0
        %v1537 = vadd.f32 0.0, %v1536
        %v1538 = vpop.f32.mrf.mxu0
        %1539 = vdwg.mxu0
        %v1541 = vsel %vm453, %v1537, 0
        %1543 = vmatprep.subr.mxu0 0.0
        %1544 = vmatpush1.msra.mxu0 0.0
        %1545 = vmatprep.subr.mxu0 0.0
        %1546 = vmatpush1.msra.mxu0 0.0
        %1547 = vmatprep.subr.mxu0 0.0
        %1548 = vmatpush1.msra.mxu0 0.0
        %1549 = vmatprep.subr.mxu0 0.0
        %1550 = vmatpush1.msra.mxu0 0.0
        %1551 = vmatprep.subr.mxu0 0.0
        %1552 = vmatpush1.msra.mxu0 0.0
        %1553 = vmatprep.subr.mxu0 0.0
        %1554 = vmatpush1.msra.mxu0 0.0
        %1555 = vmatprep.subr.mxu0 0.0
        %1556 = vmatpush1.msra.mxu0 0.0
        %1557 = vmatprep.subr.mxu0 0.0
        %1558 = vmatpush1.msra.mxu0 0.0
        %1559 = vmatprep.subr.mxu0 0.0
        %1560 = vmatpush1.msra.mxu0 0.0
        %1561 = vmatprep.subr.mxu0 0.0
        %1562 = vmatpush1.msra.mxu0 0.0
        %1563 = vmatprep.subr.mxu0 0.0
        %1564 = vmatpush1.msra.mxu0 0.0
        %1565 = vmatprep.subr.mxu0 0.0
        %1566 = vmatpush1.msra.mxu0 0.0
        %1567 = vmatprep.subr.mxu0 0.0
        %1568 = vmatpush1.msra.mxu0 0.0
        %1569 = vmatprep.subr.mxu0 0.0
        %1570 = vmatpush1.msra.mxu0 0.0
        %1571 = vmatprep.subr.mxu0 0.0
        %1572 = vmatpush1.msra.mxu0 0.0
        %1573 = vmatprep.subr.mxu0 0.0
        %1574 = vmatpush1.msra.mxu0 %v1167
        %1575 = vmatprep.subr.mxu0 0.0
        %1576 = vmatpush2.msra.mxu0 0.0
        %1577 = vmatprep.subr.mxu0 0.0
        %1578 = vmatpush2.msra.mxu0 0.0
        %1579 = vmatprep.subr.mxu0 0.0
        %1580 = vmatpush2.msra.mxu0 0.0
        %1581 = vmatprep.subr.mxu0 0.0
        %1582 = vmatpush2.msra.mxu0 0.0
        %1583 = vmatprep.subr.mxu0 0.0
        %1584 = vmatpush2.msra.mxu0 0.0
        %1585 = vmatprep.subr.mxu0 0.0
        %1586 = vmatpush2.msra.mxu0 0.0
        %1587 = vmatprep.subr.mxu0 0.0
        %1588 = vmatpush2.msra.mxu0 0.0
        %1589 = vmatprep.subr.mxu0 0.0
        %1590 = vmatpush2.msra.mxu0 0.0
        %1591 = vmatprep.subr.mxu0 0.0
        %1592 = vmatpush2.msra.mxu0 0.0
        %1593 = vmatprep.subr.mxu0 0.0
        %1594 = vmatpush2.msra.mxu0 0.0
        %1595 = vmatprep.subr.mxu0 0.0
        %1596 = vmatpush2.msra.mxu0 0.0
        %1597 = vmatprep.subr.mxu0 0.0
        %1598 = vmatpush2.msra.mxu0 0.0
        %1599 = vmatprep.subr.mxu0 0.0
        %1600 = vmatpush2.msra.mxu0 0.0
        %1601 = vmatprep.subr.mxu0 0.0
        %1602 = vmatpush2.msra.mxu0 0.0
        %1603 = vmatprep.subr.mxu0 0.0
        %1604 = vmatpush2.msra.mxu0 0.0
        %1605 = vmatprep.subr.mxu0 0.0
        %1606 = vmatpush2.msra.mxu0 0.0
        %1607 = vmatprep.mubr.f32.mxu0 0.0
        %1608 = vmatmul.mubr.f32.gmra.mxu0 %v1541
        %v1609 = vpop.f32.mrf.mxu0
        %v1610 = vadd.f32 0.0, %v1609
        %v1611 = vpop.f32.mrf.mxu0
        %1612 = vdwg.mxu0
        %v1613 = vadd.f32 %v1148, %v1610
        %s1614 = scalar_lea.vmem %s1, 96
        %v1615 = vld [vmem:[%s1614] sm:$0xff]
        %v1616 = vld [vmem:[%s1614 + $0x8] sm:$0xff]
        %v1617 = vld [vmem:[%s1614 + $0x10] sm:$0xff]
        %v1618 = vld [vmem:[%s1614 + $0x18] sm:$0xff]
        %s1619 = scalar_lea.vmem %s2, 96
        %v1620 = vld [vmem:[%s1619] sm:$0xff]
        %v1621 = vld [vmem:[%s1619 + $0x8] sm:$0xff]
        %v1622 = vld [vmem:[%s1619 + $0x10] sm:$0xff]
        %v1623 = vld [vmem:[%s1619 + $0x18] sm:$0xff]
        %s1624 = scalar_lea.vmem %s3, 96
        %v1625 = vld [vmem:[%s1624] sm:$0xff]
        %v1626 = vld [vmem:[%s1624 + $0x8] sm:$0xff]
        %v1627 = vld [vmem:[%s1624 + $0x10] sm:$0xff]
        %v1628 = vld [vmem:[%s1624 + $0x18] sm:$0xff]
        %s1629 = scalar_lea.vmem %s4, 24
        %v1630 = vld [vmem:[%s1629] sm:$0xff]
        %1631 = vmatprep.subr.mxu0 0.0
        %1632 = vmatpush1.msra.mxu0 0.0
        %1633 = vmatprep.subr.mxu0 0.0
        %1634 = vmatpush1.msra.mxu0 0.0
        %1635 = vmatprep.subr.mxu0 0.0
        %1636 = vmatpush1.msra.mxu0 0.0
        %1637 = vmatprep.subr.mxu0 0.0
        %1638 = vmatpush1.msra.mxu0 0.0
        %1639 = vmatprep.subr.mxu0 0.0
        %1640 = vmatpush1.msra.mxu0 0.0
        %1641 = vmatprep.subr.mxu0 0.0
        %1642 = vmatpush1.msra.mxu0 0.0
        %1643 = vmatprep.subr.mxu0 0.0
        %1644 = vmatpush1.msra.mxu0 0.0
        %1645 = vmatprep.subr.mxu0 0.0
        %1646 = vmatpush1.msra.mxu0 0.0
        %1647 = vmatprep.subr.mxu0 0.0
        %1648 = vmatpush1.msra.mxu0 0.0
        %1649 = vmatprep.subr.mxu0 0.0
        %1650 = vmatpush1.msra.mxu0 0.0
        %1651 = vmatprep.subr.mxu0 0.0
        %1652 = vmatpush1.msra.mxu0 0.0
        %1653 = vmatprep.subr.mxu0 0.0
        %1654 = vmatpush1.msra.mxu0 0.0
        %1655 = vmatprep.subr.mxu0 0.0
        %1656 = vmatpush1.msra.mxu0 %v1618
        %1657 = vmatprep.subr.mxu0 0.0
        %1658 = vmatpush1.msra.mxu0 %v1617
        %1659 = vmatprep.subr.mxu0 0.0
        %1660 = vmatpush1.msra.mxu0 %v1616
        %1661 = vmatprep.subr.mxu0 0.0
        %1662 = vmatpush1.msra.mxu0 %v1615
        %1663 = vmatprep.subr.mxu0 0.0
        %1664 = vmatpush2.msra.mxu0 0.0
        %1665 = vmatprep.subr.mxu0 0.0
        %1666 = vmatpush2.msra.mxu0 0.0
        %1667 = vmatprep.subr.mxu0 0.0
        %1668 = vmatpush2.msra.mxu0 0.0
        %1669 = vmatprep.subr.mxu0 0.0
        %1670 = vmatpush2.msra.mxu0 0.0
        %1671 = vmatprep.subr.mxu0 0.0
        %1672 = vmatpush2.msra.mxu0 0.0
        %1673 = vmatprep.subr.mxu0 0.0
        %1674 = vmatpush2.msra.mxu0 0.0
        %1675 = vmatprep.subr.mxu0 0.0
        %1676 = vmatpush2.msra.mxu0 0.0
        %1677 = vmatprep.subr.mxu0 0.0
        %1678 = vmatpush2.msra.mxu0 0.0
        %1679 = vmatprep.subr.mxu0 0.0
        %1680 = vmatpush2.msra.mxu0 0.0
        %1681 = vmatprep.subr.mxu0 0.0
        %1682 = vmatpush2.msra.mxu0 0.0
        %1683 = vmatprep.subr.mxu0 0.0
        %1684 = vmatpush2.msra.mxu0 0.0
        %1685 = vmatprep.subr.mxu0 0.0
        %1686 = vmatpush2.msra.mxu0 0.0
        %1687 = vmatprep.subr.mxu0 0.0
        %1688 = vmatpush2.msra.mxu0 0.0
        %1689 = vmatprep.subr.mxu0 0.0
        %1690 = vmatpush2.msra.mxu0 0.0
        %1691 = vmatprep.subr.mxu0 0.0
        %1692 = vmatpush2.msra.mxu0 0.0
        %1693 = vmatprep.subr.mxu0 0.0
        %1694 = vmatpush2.msra.mxu0 0.0
        %1695 = vmatprep.mubr.f32.mxu0 0.0
        %1696 = vmatmul.mubr.f32.gmra.mxu0 %v241
        %v1697 = vpop.f32.mrf.mxu0
        %v1698 = vadd.f32 0.0, %v1697
        %v1699 = vpop.f32.mrf.mxu0
        %1700 = vdwg.mxu0
        %1701 = vmatprep.subr.mxu0 0.0
        %1702 = vmatpush1.msra.mxu0 0.0
        %1703 = vmatprep.subr.mxu0 0.0
        %1704 = vmatpush1.msra.mxu0 0.0
        %1705 = vmatprep.subr.mxu0 0.0
        %1706 = vmatpush1.msra.mxu0 0.0
        %1707 = vmatprep.subr.mxu0 0.0
        %1708 = vmatpush1.msra.mxu0 0.0
        %1709 = vmatprep.subr.mxu0 0.0
        %1710 = vmatpush1.msra.mxu0 0.0
        %1711 = vmatprep.subr.mxu0 0.0
        %1712 = vmatpush1.msra.mxu0 0.0
        %1713 = vmatprep.subr.mxu0 0.0
        %1714 = vmatpush1.msra.mxu0 0.0
        %1715 = vmatprep.subr.mxu0 0.0
        %1716 = vmatpush1.msra.mxu0 0.0
        %1717 = vmatprep.subr.mxu0 0.0
        %1718 = vmatpush1.msra.mxu0 0.0
        %1719 = vmatprep.subr.mxu0 0.0
        %1720 = vmatpush1.msra.mxu0 0.0
        %1721 = vmatprep.subr.mxu0 0.0
        %1722 = vmatpush1.msra.mxu0 0.0
        %1723 = vmatprep.subr.mxu0 0.0
        %1724 = vmatpush1.msra.mxu0 0.0
        %1725 = vmatprep.subr.mxu0 0.0
        %1726 = vmatpush1.msra.mxu0 %v1623
        %1727 = vmatprep.subr.mxu0 0.0
        %1728 = vmatpush1.msra.mxu0 %v1622
        %1729 = vmatprep.subr.mxu0 0.0
        %1730 = vmatpush1.msra.mxu0 %v1621
        %1731 = vmatprep.subr.mxu0 0.0
        %1732 = vmatpush1.msra.mxu0 %v1620
        %1733 = vmatprep.subr.mxu0 0.0
        %1734 = vmatpush2.msra.mxu0 0.0
        %1735 = vmatprep.subr.mxu0 0.0
        %1736 = vmatpush2.msra.mxu0 0.0
        %1737 = vmatprep.subr.mxu0 0.0
        %1738 = vmatpush2.msra.mxu0 0.0
        %1739 = vmatprep.subr.mxu0 0.0
        %1740 = vmatpush2.msra.mxu0 0.0
        %1741 = vmatprep.subr.mxu0 0.0
        %1742 = vmatpush2.msra.mxu0 0.0
        %1743 = vmatprep.subr.mxu0 0.0
        %1744 = vmatpush2.msra.mxu0 0.0
        %1745 = vmatprep.subr.mxu0 0.0
        %1746 = vmatpush2.msra.mxu0 0.0
        %1747 = vmatprep.subr.mxu0 0.0
        %1748 = vmatpush2.msra.mxu0 0.0
        %1749 = vmatprep.subr.mxu0 0.0
        %1750 = vmatpush2.msra.mxu0 0.0
        %1751 = vmatprep.subr.mxu0 0.0
        %1752 = vmatpush2.msra.mxu0 0.0
        %1753 = vmatprep.subr.mxu0 0.0
        %1754 = vmatpush2.msra.mxu0 0.0
        %1755 = vmatprep.subr.mxu0 0.0
        %1756 = vmatpush2.msra.mxu0 0.0
        %1757 = vmatprep.subr.mxu0 0.0
        %1758 = vmatpush2.msra.mxu0 0.0
        %1759 = vmatprep.subr.mxu0 0.0
        %1760 = vmatpush2.msra.mxu0 0.0
        %1761 = vmatprep.subr.mxu0 0.0
        %1762 = vmatpush2.msra.mxu0 0.0
        %1763 = vmatprep.subr.mxu0 0.0
        %1764 = vmatpush2.msra.mxu0 0.0
        %1765 = vmatprep.mubr.f32.mxu0 0.0
        %1766 = vmatmul.mubr.f32.gmra.mxu0 %v241
        %v1767 = vpop.f32.mrf.mxu0
        %v1768 = vadd.f32 0.0, %v1767
        %v1769 = vpop.f32.mrf.mxu0
        %1770 = vdwg.mxu0
        %1771 = vmatprep.subr.mxu0 0.0
        %1772 = vmatpush1.msra.mxu0 0.0
        %1773 = vmatprep.subr.mxu0 0.0
        %1774 = vmatpush1.msra.mxu0 0.0
        %1775 = vmatprep.subr.mxu0 0.0
        %1776 = vmatpush1.msra.mxu0 0.0
        %1777 = vmatprep.subr.mxu0 0.0
        %1778 = vmatpush1.msra.mxu0 0.0
        %1779 = vmatprep.subr.mxu0 0.0
        %1780 = vmatpush1.msra.mxu0 0.0
        %1781 = vmatprep.subr.mxu0 0.0
        %1782 = vmatpush1.msra.mxu0 0.0
        %1783 = vmatprep.subr.mxu0 0.0
        %1784 = vmatpush1.msra.mxu0 0.0
        %1785 = vmatprep.subr.mxu0 0.0
        %1786 = vmatpush1.msra.mxu0 0.0
        %1787 = vmatprep.subr.mxu0 0.0
        %1788 = vmatpush1.msra.mxu0 0.0
        %1789 = vmatprep.subr.mxu0 0.0
        %1790 = vmatpush1.msra.mxu0 0.0
        %1791 = vmatprep.subr.mxu0 0.0
        %1792 = vmatpush1.msra.mxu0 0.0
        %1793 = vmatprep.subr.mxu0 0.0
        %1794 = vmatpush1.msra.mxu0 0.0
        %1795 = vmatprep.subr.mxu0 0.0
        %1796 = vmatpush1.msra.mxu0 %v1628
        %1797 = vmatprep.subr.mxu0 0.0
        %1798 = vmatpush1.msra.mxu0 %v1627
        %1799 = vmatprep.subr.mxu0 0.0
        %1800 = vmatpush1.msra.mxu0 %v1626
        %1801 = vmatprep.subr.mxu0 0.0
        %1802 = vmatpush1.msra.mxu0 %v1625
        %1803 = vmatprep.subr.mxu0 0.0
        %1804 = vmatpush2.msra.mxu0 0.0
        %1805 = vmatprep.subr.mxu0 0.0
        %1806 = vmatpush2.msra.mxu0 0.0
        %1807 = vmatprep.subr.mxu0 0.0
        %1808 = vmatpush2.msra.mxu0 0.0
        %1809 = vmatprep.subr.mxu0 0.0
        %1810 = vmatpush2.msra.mxu0 0.0
        %1811 = vmatprep.subr.mxu0 0.0
        %1812 = vmatpush2.msra.mxu0 0.0
        %1813 = vmatprep.subr.mxu0 0.0
        %1814 = vmatpush2.msra.mxu0 0.0
        %1815 = vmatprep.subr.mxu0 0.0
        %1816 = vmatpush2.msra.mxu0 0.0
        %1817 = vmatprep.subr.mxu0 0.0
        %1818 = vmatpush2.msra.mxu0 0.0
        %1819 = vmatprep.subr.mxu0 0.0
        %1820 = vmatpush2.msra.mxu0 0.0
        %1821 = vmatprep.subr.mxu0 0.0
        %1822 = vmatpush2.msra.mxu0 0.0
        %1823 = vmatprep.subr.mxu0 0.0
        %1824 = vmatpush2.msra.mxu0 0.0
        %1825 = vmatprep.subr.mxu0 0.0
        %1826 = vmatpush2.msra.mxu0 0.0
        %1827 = vmatprep.subr.mxu0 0.0
        %1828 = vmatpush2.msra.mxu0 0.0
        %1829 = vmatprep.subr.mxu0 0.0
        %1830 = vmatpush2.msra.mxu0 0.0
        %1831 = vmatprep.subr.mxu0 0.0
        %1832 = vmatpush2.msra.mxu0 0.0
        %1833 = vmatprep.subr.mxu0 0.0
        %1834 = vmatpush2.msra.mxu0 0.0
        %1835 = vmatprep.mubr.f32.mxu0 0.0
        %1836 = vmatmul.mubr.f32.gmra.mxu0 %v241
        %v1837 = vpop.f32.mrf.mxu0
        %v1838 = vadd.f32 0.0, %v1837
        %v1839 = vpop.f32.mrf.mxu0
        %1840 = vdwg.mxu0
        %v1842 = vsel %vm453, %v1698, 0
        %v1845 = vsel %vm453, %v1768, 0
        %1847 = vmatprep.subr.mxu0 0.0
        %1848 = vmatpush1.xpose.msra.mxu0 0.0
        %1849 = vmatprep.subr.mxu0 0.0
        %1850 = vmatpush1.xpose.msra.mxu0 0.0
        %1851 = vmatprep.subr.mxu0 0.0
        %1852 = vmatpush1.xpose.msra.mxu0 0.0
        %1853 = vmatprep.subr.mxu0 0.0
        %1854 = vmatpush1.xpose.msra.mxu0 0.0
        %1855 = vmatprep.subr.mxu0 0.0
        %1856 = vmatpush1.xpose.msra.mxu0 0.0
        %1857 = vmatprep.subr.mxu0 0.0
        %1858 = vmatpush1.xpose.msra.mxu0 0.0
        %1859 = vmatprep.subr.mxu0 0.0
        %1860 = vmatpush1.xpose.msra.mxu0 0.0
        %1861 = vmatprep.subr.mxu0 0.0
        %1862 = vmatpush1.xpose.msra.mxu0 0.0
        %1863 = vmatprep.subr.mxu0 0.0
        %1864 = vmatpush1.xpose.msra.mxu0 0.0
        %1865 = vmatprep.subr.mxu0 0.0
        %1866 = vmatpush1.xpose.msra.mxu0 0.0
        %1867 = vmatprep.subr.mxu0 0.0
        %1868 = vmatpush1.xpose.msra.mxu0 0.0
        %1869 = vmatprep.subr.mxu0 0.0
        %1870 = vmatpush1.xpose.msra.mxu0 0.0
        %1871 = vmatprep.subr.mxu0 0.0
        %1872 = vmatpush1.xpose.msra.mxu0 0.0
        %1873 = vmatprep.subr.mxu0 0.0
        %1874 = vmatpush1.xpose.msra.mxu0 0.0
        %1875 = vmatprep.subr.mxu0 0.0
        %1876 = vmatpush1.xpose.msra.mxu0 0.0
        %1877 = vmatprep.subr.mxu0 0.0
        %1878 = vmatpush1.xpose.msra.mxu0 %v1845
        %1879 = vmatprep.subr.mxu0 0.0
        %1880 = vmatpush2.xpose.msra.mxu0 0.0
        %1881 = vmatprep.subr.mxu0 0.0
        %1882 = vmatpush2.xpose.msra.mxu0 0.0
        %1883 = vmatprep.subr.mxu0 0.0
        %1884 = vmatpush2.xpose.msra.mxu0 0.0
        %1885 = vmatprep.subr.mxu0 0.0
        %1886 = vmatpush2.xpose.msra.mxu0 0.0
        %1887 = vmatprep.subr.mxu0 0.0
        %1888 = vmatpush2.xpose.msra.mxu0 0.0
        %1889 = vmatprep.subr.mxu0 0.0
        %1890 = vmatpush2.xpose.msra.mxu0 0.0
        %1891 = vmatprep.subr.mxu0 0.0
        %1892 = vmatpush2.xpose.msra.mxu0 0.0
        %1893 = vmatprep.subr.mxu0 0.0
        %1894 = vmatpush2.xpose.msra.mxu0 0.0
        %1895 = vmatprep.subr.mxu0 0.0
        %1896 = vmatpush2.xpose.msra.mxu0 0.0
        %1897 = vmatprep.subr.mxu0 0.0
        %1898 = vmatpush2.xpose.msra.mxu0 0.0
        %1899 = vmatprep.subr.mxu0 0.0
        %1900 = vmatpush2.xpose.msra.mxu0 0.0
        %1901 = vmatprep.subr.mxu0 0.0
        %1902 = vmatpush2.xpose.msra.mxu0 0.0
        %1903 = vmatprep.subr.mxu0 0.0
        %1904 = vmatpush2.xpose.msra.mxu0 0.0
        %1905 = vmatprep.subr.mxu0 0.0
        %1906 = vmatpush2.xpose.msra.mxu0 0.0
        %1907 = vmatprep.subr.mxu0 0.0
        %1908 = vmatpush2.xpose.msra.mxu0 0.0
        %1909 = vmatprep.subr.mxu0 0.0
        %1910 = vmatpush2.xpose.msra.mxu0 0.0
        %1911 = vmatprep.mubr.f32.mxu0 0.0
        %1912 = vmatmul.mubr.f32.gmra.mxu0 %v1842
        %v1913 = vpop.f32.mrf.mxu0
        %v1914 = vadd.f32 0.0, %v1913
        %v1915 = vpop.f32.mrf.mxu0
        %1916 = vdwg.mxu0
        %v1917 = vmul.f32 %v1914, 0.35355338
        %v1918 = vsel %vm225, %v1917, -1e+30
        %v1919 = vsel %vm453, %v1918, -inf
        %1920 = vmax.xlane.f32.xlu0 %v1919
        %v1921 = vpop.xlane.xlu0 %1920
        %v1922 = vsub.f32 %v1918, %v1921
        %v1923 = vmul.f32 %v1922, 1.442695
        %v1924 = vpow.pop %v1923
        %v1925 = vsel %vm453, %v1924, 0.0
        %1926 = vadd.xlane.f32.xlu0 %v1925
        %v1927 = vpop.xlane.xlu0 %1926
        %v1928 = vrcp.pop %v1927
        %v1929 = vmul.f32 %v1924, %v1928
        %v1931 = vsel %vm453, %v1929, 0
        %1933 = vmatprep.subr.mxu0 0.0
        %1934 = vmatpush1.msra.mxu0 0.0
        %1935 = vmatprep.subr.mxu0 0.0
        %1936 = vmatpush1.msra.mxu0 0.0
        %1937 = vmatprep.subr.mxu0 0.0
        %1938 = vmatpush1.msra.mxu0 0.0
        %1939 = vmatprep.subr.mxu0 0.0
        %1940 = vmatpush1.msra.mxu0 0.0
        %1941 = vmatprep.subr.mxu0 0.0
        %1942 = vmatpush1.msra.mxu0 0.0
        %1943 = vmatprep.subr.mxu0 0.0
        %1944 = vmatpush1.msra.mxu0 0.0
        %1945 = vmatprep.subr.mxu0 0.0
        %1946 = vmatpush1.msra.mxu0 0.0
        %1947 = vmatprep.subr.mxu0 0.0
        %1948 = vmatpush1.msra.mxu0 0.0
        %1949 = vmatprep.subr.mxu0 0.0
        %1950 = vmatpush1.msra.mxu0 0.0
        %1951 = vmatprep.subr.mxu0 0.0
        %1952 = vmatpush1.msra.mxu0 0.0
        %1953 = vmatprep.subr.mxu0 0.0
        %1954 = vmatpush1.msra.mxu0 0.0
        %1955 = vmatprep.subr.mxu0 0.0
        %1956 = vmatpush1.msra.mxu0 0.0
        %1957 = vmatprep.subr.mxu0 0.0
        %1958 = vmatpush1.msra.mxu0 0.0
        %1959 = vmatprep.subr.mxu0 0.0
        %1960 = vmatpush1.msra.mxu0 0.0
        %1961 = vmatprep.subr.mxu0 0.0
        %1962 = vmatpush1.msra.mxu0 0.0
        %1963 = vmatprep.subr.mxu0 0.0
        %1964 = vmatpush1.msra.mxu0 %v1838
        %1965 = vmatprep.subr.mxu0 0.0
        %1966 = vmatpush2.msra.mxu0 0.0
        %1967 = vmatprep.subr.mxu0 0.0
        %1968 = vmatpush2.msra.mxu0 0.0
        %1969 = vmatprep.subr.mxu0 0.0
        %1970 = vmatpush2.msra.mxu0 0.0
        %1971 = vmatprep.subr.mxu0 0.0
        %1972 = vmatpush2.msra.mxu0 0.0
        %1973 = vmatprep.subr.mxu0 0.0
        %1974 = vmatpush2.msra.mxu0 0.0
        %1975 = vmatprep.subr.mxu0 0.0
        %1976 = vmatpush2.msra.mxu0 0.0
        %1977 = vmatprep.subr.mxu0 0.0
        %1978 = vmatpush2.msra.mxu0 0.0
        %1979 = vmatprep.subr.mxu0 0.0
        %1980 = vmatpush2.msra.mxu0 0.0
        %1981 = vmatprep.subr.mxu0 0.0
        %1982 = vmatpush2.msra.mxu0 0.0
        %1983 = vmatprep.subr.mxu0 0.0
        %1984 = vmatpush2.msra.mxu0 0.0
        %1985 = vmatprep.subr.mxu0 0.0
        %1986 = vmatpush2.msra.mxu0 0.0
        %1987 = vmatprep.subr.mxu0 0.0
        %1988 = vmatpush2.msra.mxu0 0.0
        %1989 = vmatprep.subr.mxu0 0.0
        %1990 = vmatpush2.msra.mxu0 0.0
        %1991 = vmatprep.subr.mxu0 0.0
        %1992 = vmatpush2.msra.mxu0 0.0
        %1993 = vmatprep.subr.mxu0 0.0
        %1994 = vmatpush2.msra.mxu0 0.0
        %1995 = vmatprep.subr.mxu0 0.0
        %1996 = vmatpush2.msra.mxu0 0.0
        %1997 = vmatprep.mubr.f32.mxu0 0.0
        %1998 = vmatmul.mubr.f32.gmra.mxu0 %v1931
        %v1999 = vpop.f32.mrf.mxu0
        %v2000 = vadd.f32 0.0, %v1999
        %v2001 = vpop.f32.mrf.mxu0
        %2002 = vdwg.mxu0
        %v2004 = vsel %vm453, %v2000, 0
        %2006 = vmatprep.subr.mxu0 0.0
        %2007 = vmatpush1.msra.mxu0 0.0
        %2008 = vmatprep.subr.mxu0 0.0
        %2009 = vmatpush1.msra.mxu0 0.0
        %2010 = vmatprep.subr.mxu0 0.0
        %2011 = vmatpush1.msra.mxu0 0.0
        %2012 = vmatprep.subr.mxu0 0.0
        %2013 = vmatpush1.msra.mxu0 0.0
        %2014 = vmatprep.subr.mxu0 0.0
        %2015 = vmatpush1.msra.mxu0 0.0
        %2016 = vmatprep.subr.mxu0 0.0
        %2017 = vmatpush1.msra.mxu0 0.0
        %2018 = vmatprep.subr.mxu0 0.0
        %2019 = vmatpush1.msra.mxu0 0.0
        %2020 = vmatprep.subr.mxu0 0.0
        %2021 = vmatpush1.msra.mxu0 0.0
        %2022 = vmatprep.subr.mxu0 0.0
        %2023 = vmatpush1.msra.mxu0 0.0
        %2024 = vmatprep.subr.mxu0 0.0
        %2025 = vmatpush1.msra.mxu0 0.0
        %2026 = vmatprep.subr.mxu0 0.0
        %2027 = vmatpush1.msra.mxu0 0.0
        %2028 = vmatprep.subr.mxu0 0.0
        %2029 = vmatpush1.msra.mxu0 0.0
        %2030 = vmatprep.subr.mxu0 0.0
        %2031 = vmatpush1.msra.mxu0 0.0
        %2032 = vmatprep.subr.mxu0 0.0
        %2033 = vmatpush1.msra.mxu0 0.0
        %2034 = vmatprep.subr.mxu0 0.0
        %2035 = vmatpush1.msra.mxu0 0.0
        %2036 = vmatprep.subr.mxu0 0.0
        %2037 = vmatpush1.msra.mxu0 %v1630
        %2038 = vmatprep.subr.mxu0 0.0
        %2039 = vmatpush2.msra.mxu0 0.0
        %2040 = vmatprep.subr.mxu0 0.0
        %2041 = vmatpush2.msra.mxu0 0.0
        %2042 = vmatprep.subr.mxu0 0.0
        %2043 = vmatpush2.msra.mxu0 0.0
        %2044 = vmatprep.subr.mxu0 0.0
        %2045 = vmatpush2.msra.mxu0 0.0
        %2046 = vmatprep.subr.mxu0 0.0
        %2047 = vmatpush2.msra.mxu0 0.0
        %2048 = vmatprep.subr.mxu0 0.0
        %2049 = vmatpush2.msra.mxu0 0.0
        %2050 = vmatprep.subr.mxu0 0.0
        %2051 = vmatpush2.msra.mxu0 0.0
        %2052 = vmatprep.subr.mxu0 0.0
        %2053 = vmatpush2.msra.mxu0 0.0
        %2054 = vmatprep.subr.mxu0 0.0
        %2055 = vmatpush2.msra.mxu0 0.0
        %2056 = vmatprep.subr.mxu0 0.0
        %2057 = vmatpush2.msra.mxu0 0.0
        %2058 = vmatprep.subr.mxu0 0.0
        %2059 = vmatpush2.msra.mxu0 0.0
        %2060 = vmatprep.subr.mxu0 0.0
        %2061 = vmatpush2.msra.mxu0 0.0
        %2062 = vmatprep.subr.mxu0 0.0
        %2063 = vmatpush2.msra.mxu0 0.0
        %2064 = vmatprep.subr.mxu0 0.0
        %2065 = vmatpush2.msra.mxu0 0.0
        %2066 = vmatprep.subr.mxu0 0.0
        %2067 = vmatpush2.msra.mxu0 0.0
        %2068 = vmatprep.subr.mxu0 0.0
        %2069 = vmatpush2.msra.mxu0 0.0
        %2070 = vmatprep.mubr.f32.mxu0 0.0
        %2071 = vmatmul.mubr.f32.gmra.mxu0 %v2004
        %v2072 = vpop.f32.mrf.mxu0
        %v2073 = vadd.f32 0.0, %v2072
        %v2074 = vpop.f32.mrf.mxu0
        %2075 = vdwg.mxu0
        %v2076 = vadd.f32 %v1613, %v2073
        %2077 = vst.msk [vmem:[%s215] sm:$0xff] %vm239, %v2076
        %s2078 = sand.u32 %s137, 1
        %s2079 = scalar_lea.sflag [#allocation3], %s2078
        %s2080 = sand.u32 %s137, 1
        %s2081 = smul.addr %s2080, 8
        %s2082 = scalar_lea.vmem [#allocation2], %s2081
        // Predicated region
        $region41: #{tpu_custom_call.1} parent=39 // pred_check
          %p2083 = pneg %p147
        $region42: #{tpu_custom_call.1} parent=39 // pred_check_branch
          %2085 = sbr.rel (%p2083) target = $region44
        $region43: #{tpu_custom_call.1} parent=39 // pred_region
          %s2087 = ssub.s32 128, 128
          %2088 = vsyncadd %s2079, %s2087
          %s2089 = smul.addr %s19, 128
          %s2090 = scalar_lea.hbm %s5, %s2089
          %s2092 = sshll.u32 %s2082, 4
          %s2093 = int_to_ptr.vmem [resolvable:$true] %s2092
          %2095 = dma.vmem_to_hbm [thread:$0]  %s2093, 128, %s2090, %s2079
        $region44: #{tpu_custom_call.1} parent=39 // pred_fallthru
          _
      $region40: #{tpu_custom_call.1} parent=5 // pred_fallthru
        _
      %p2096 = scmp.le.s32.totalorder 2, %s14
      // Predicated region
      $region45: #{tpu_custom_call.1} parent=5 // pred_check
        %p2097 = pneg %p2096
      $region46: #{tpu_custom_call.1} parent=5 // pred_check_branch
        %2099 = sbr.rel (%p2097) target = $region48
      $region47: #{tpu_custom_call.1} parent=5 // pred_region
        %s2100 = ssub.s32 %s14, 2
        // Predicated region
        $region49: #{tpu_custom_call.1} parent=47 // pred_check
          %p2101 = pneg %p153
        $region50: #{tpu_custom_call.1} parent=47 // pred_check_branch
          %2103 = sbr.rel (%p2101) target = $region52
        $region51: #{tpu_custom_call.1} parent=47 // pred_region
          %s2104 = sand.u32 %s138, 1
          %s2105 = scalar_lea.sflag [#allocation3], %s2104
          %s2106 = sand.u32 %s138, 1
          %s2107 = smul.addr %s2106, 8
          %s2108 = scalar_lea.vmem [#allocation2], %s2107
          %2109 = dma.done %s2105, 128
        $region52: #{tpu_custom_call.1} parent=47 // pred_fallthru
          _
      $region48: #{tpu_custom_call.1} parent=5 // pred_fallthru
        _
    $region6: #{tpu_custom_call.1} parent=1 // loop_footer
      %s18 = sadd.s32 1, %s14
    $region7: #{tpu_custom_call.1} parent=1 // loop_footer_branch
      %13 = sbr.rel target = $region3
    $region8: #{tpu_custom_call.1} parent=1 // loop_exit
      _
    %2110 = vsyncpa [#allocation3], 1
    %s2111 = scalar_lea.sflag [#allocation3], 1
    %2112 = vsyncpa %s2111, 1

</llo_original>
